<compile_context>
chip_gen: v7x
topology: tpu7x:2x2x1
jax: 0.10.0
libtpu: 0.0.40
codegen_flags: <defaults>
</compile_context>

<pallas_src>
import math
import functools

import jax
import jax.numpy as jnp
from jax.experimental import pallas as pl
from jax.experimental.pallas import tpu as pltpu

EPS = 1e-6
_GELU_C = math.sqrt(2.0 / math.pi)


# ----------------------------- in-kernel helpers -----------------------------

def _layernorm(x, w, b, eps=EPS):
    mu = jnp.mean(x, axis=-1, keepdims=True)
    var = jnp.mean(jnp.square(x - mu), axis=-1, keepdims=True)
    return (x - mu) * jax.lax.rsqrt(var + eps) * w + b


def _gelu(x):
    # tanh-approximate GELU: routes the transcendental to the EUP slot instead
    # of a ~10-op VALU polynomial (matches torch GELU to ~1e-3).
    return 0.5 * x * (1.0 + jnp.tanh(_GELU_C * (x + 0.044715 * x * x * x)))


# --------------------------------- kernel ------------------------------------

def _vit_kernel(patch_ref, ew_ref, eb_ref, elnw_ref, elnb_ref, pe_ref,
                ln1w, ln1b, wqkv, bqkv, wproj, bproj,
                ln2w, ln2b, wfc1, bfc1, wfc2, bfc2,
                fnw_ref, fnb_ref, o_ref, *, num_heads, scale):
    d = pl.program_id(1)
    depth = pl.num_programs(1)
    bf16 = jnp.bfloat16

    # ---- d == 0: patch embedding + LayerNorm(eps=1e-6) + positional encoding
    @pl.when(d == 0)
    def _():
        p = patch_ref[0]                                            # (N, K) bf16
        y = jnp.dot(p, ew_ref[...],
                    preferred_element_type=jnp.float32) + eb_ref[...]
        y = _layernorm(y, elnw_ref[...], elnb_ref[...])
        o_ref[0] = y + pe_ref[...]

    x = o_ref[0]                                                    # (N, C) f32, VMEM-resident
    n, c = x.shape
    hd = c // num_heads

    # ---------------- attention branch ----------------
    xn = _layernorm(x, ln1w[0], ln1b[0])
    qkv = jnp.dot(xn.astype(bf16), wqkv[0],
                  preferred_element_type=jnp.float32) + bqkv[0]     # (N, 3C) f32

    # Gather heads once into head-major (H, N, hd) tensors so the score /
    # P@V matmuls run as batched einsums instead of per-head tiny matmuls.
    q3 = jnp.stack([qkv[:, h * hd:(h + 1) * hd]
                    for h in range(num_heads)], axis=0).astype(bf16)
    k3 = jnp.stack([qkv[:, c + h * hd:c + (h + 1) * hd]
                    for h in range(num_heads)], axis=0).astype(bf16)
    v3 = jnp.stack([qkv[:, 2 * c + h * hd:2 * c + (h + 1) * hd]
                    for h in range(num_heads)], axis=0).astype(bf16)

    # scores = q @ k^T * scale   (reference MULTIPLIES by sqrt(head_dim))
    s = jnp.einsum('hnd,hmd->hnm', q3, k3,
                   preferred_element_type=jnp.float32) * scale       # (H, N, N) f32
    s = s - jnp.max(s, axis=-1, keepdims=True)
    p = jnp.exp(s)                                                   # unnormalized
    denom = jnp.sum(p, axis=-1, keepdims=True)                       # (H, N, 1)
    pv = jnp.einsum('hnm,hmd->hnd', p.astype(bf16), v3,
                    preferred_element_type=jnp.float32)              # (H, N, hd)
    # normalize after P@V: (H,N,hd) multiply instead of (H,N,N); EUP reciprocal
    pv = pv * pl.reciprocal(denom, approx=True)

    # single (N,C)@(C,C) output projection on concatenated heads
    attn = jnp.concatenate([pv[h] for h in range(num_heads)], axis=-1)
    attn = jnp.dot(attn.astype(bf16), wproj[0],
                   preferred_element_type=jnp.float32) + bproj[0]
    x = x + attn

    # ---------------- MLP branch ----------------
    xn2 = _layernorm(x, ln2w[0], ln2b[0])
    h1 = jnp.dot(xn2.astype(bf16), wfc1[0],
                 preferred_element_type=jnp.float32) + bfc1[0]
    h1 = _gelu(h1)
    y = jnp.dot(h1.astype(bf16), wfc2[0],
                preferred_element_type=jnp.float32) + bfc2[0]
    o_ref[0] = x + y

    # ---- final LayerNorm folded into the last depth step ----
    @pl.when(d == depth - 1)
    def _():
        o_ref[0] = _layernorm(o_ref[0], fnw_ref[...], fnb_ref[...])


# --------------------------------- wrapper -----------------------------------

_BLOCK_PARAM_ORDER = ("ln1_w", "ln1_b", "w_qkv", "b_qkv", "w_proj", "b_proj",
                      "ln2_w", "ln2_b", "w_fc1", "b_fc1", "w_fc2", "b_fc2")


def _const_spec(arr):
    nd = arr.ndim
    return pl.BlockSpec(arr.shape, lambda b, d, _nd=nd: (0,) * _nd)


def _layer_spec(arr):
    nd = arr.ndim
    return pl.BlockSpec((1,) + arr.shape[1:],
                        lambda b, d, _nd=nd: (d,) + (0,) * (_nd - 1))


def vit_forward(x_nchw, params):
    """Full VisionTransformer forward (image_embed=True path) in one pallas_call."""
    B, Cin, H, W = x_nchw.shape
    p = params["patch_size"]
    nh = params["num_heads"]
    gh, gw = H // p, W // p
    N = gh * gw
    K = Cin * p * p
    C = params["embed_w"].shape[1]
    depth = len(params["blocks"])

    # patchify: (B,Cin,gh,p,gw,p) -> (B,gh,gw,Cin,p,p) -> (B,N,Cin*p*p)  (c,ph,pw order)
    patches = x_nchw.reshape(B, Cin, gh, p, gw, p)
    patches = patches.transpose(0, 2, 4, 1, 3, 5).reshape(B, N, K)
    patches = patches.astype(jnp.bfloat16)          # halve input DMA traffic

    # stack per-layer weights along a leading depth axis (indexed by the depth grid axis)
    stacked = [jnp.stack([bp[k] for bp in params["blocks"]], axis=0)
               for k in _BLOCK_PARAM_ORDER]

    embed_args = (params["embed_w"], params["embed_b"],
                  params["embed_ln_w"], params["embed_ln_b"], params["pe"])
    final_args = (params["norm_w"], params["norm_b"])

    scale = float((C // nh) ** 0.5)                  # reference: * head_dim ** 0.5
    kernel = functools.partial(_vit_kernel, num_heads=nh, scale=scale)

    in_specs = ([pl.BlockSpec((1, N, K), lambda b, d: (b, 0, 0))]
                + [_const_spec(a) for a in embed_args]
                + [_layer_spec(a) for a in stacked]
                + [_const_spec(a) for a in final_args])

    return pl.pallas_call(
        kernel,
        out_shape=jax.ShapeDtypeStruct((B, N, C), jnp.float32),
        grid=(B, depth),
        in_specs=in_specs,
        out_specs=pl.BlockSpec((1, N, C), lambda b, d: (b, 0, 0)),
        compiler_params=pltpu.CompilerParams(
            dimension_semantics=("parallel", "arbitrary"),
            vmem_limit_bytes=32 * 1024 * 1024),      # above v5e's 16 MiB default, safe on v7x
    )(patches, *embed_args, *stacked, *final_args)


# ------------------------------ parameter setup -------------------------------

def make_pe(max_len, d_model):
    position = jnp.arange(max_len, dtype=jnp.float32)[:, None]
    div_term = jnp.exp(jnp.arange(0, d_model, 2, dtype=jnp.float32) *
                       (-(math.log(10000.0) / d_model)))
    pe = jnp.zeros((max_len, d_model), jnp.float32)
    pe = pe.at[:, 0::2].set(jnp.sin(position * div_term))
    pe = pe.at[:, 1::2].set(jnp.cos(position * div_term))
    return pe


def init_params(key, image_size, patch_size, in_c, embed_dim, depth, num_heads):
    hidden = int(embed_dim * 0.5)                    # reference: int(dim * 0.5)
    K = in_c * patch_size * patch_size
    n_patches = (image_size // patch_size) ** 2
    keys = list(jax.random.split(key, 1 + 4 * depth))
    kit = iter(keys)
    bf16 = jnp.bfloat16

    def trunc(k, shape, std=0.01):
        return jax.random.truncated_normal(k, -2.0, 2.0, shape, jnp.float32) * std

    fan_out = embed_dim * patch_size * patch_size
    conv_w = (jax.random.normal(next(kit), (embed_dim, in_c, patch_size, patch_size),
                                jnp.float32) * math.sqrt(2.0 / fan_out))

    params = {
        "patch_size": patch_size,
        "num_heads": num_heads,
        "embed_w": conv_w.reshape(embed_dim, K).T.astype(bf16),     # (K, C) bf16
        "embed_b": jnp.zeros((1, embed_dim), jnp.float32),
        "embed_ln_w": jnp.ones((1, embed_dim), jnp.float32),
        "embed_ln_b": jnp.zeros((1, embed_dim), jnp.float32),
        "pe": make_pe(n_patches, embed_dim),
        "norm_w": jnp.ones((1, embed_dim), jnp.float32),
        "norm_b": jnp.zeros((1, embed_dim), jnp.float32),
        "blocks": [],
    }
    for _ in range(depth):
        params["blocks"].append({
            "ln1_w": jnp.ones((1, embed_dim), jnp.float32),
            "ln1_b": jnp.zeros((1, embed_dim), jnp.float32),
            "w_qkv": trunc(next(kit), (embed_dim, 3 * embed_dim)).astype(bf16),
            "b_qkv": jnp.zeros((1, 3 * embed_dim), jnp.float32),
            "w_proj": trunc(next(kit), (embed_dim, embed_dim)).astype(bf16),
            "b_proj": jnp.zeros((1, embed_dim), jnp.float32),
            "ln2_w": jnp.ones((1, embed_dim), jnp.float32),
            "ln2_b": jnp.zeros((1, embed_dim), jnp.float32),
            "w_fc1": trunc(next(kit), (embed_dim, hidden)).astype(bf16),
            "b_fc1": jnp.zeros((1, hidden), jnp.float32),
            "w_fc2": trunc(next(kit), (hidden, embed_dim)).astype(bf16),
            "b_fc2": jnp.zeros((1, embed_dim), jnp.float32),
        })
    return params


# ----------------------------------- main -------------------------------------

if __name__ == "__main__":
    root = jax.random.PRNGKey(0)
    k_params, k_input = jax.random.split(root)

    # small config: image 16x16, patch 4 -> 16 tokens, embed 32, 2 blocks, 4 heads
    cfg = dict(image_size=16, patch_size=4, in_c=4, embed_dim=32,
               depth=2, num_heads=4)
    params = init_params(k_params, **cfg)

    x = jax.random.normal(k_input, (2, cfg["in_c"], cfg["image_size"],
                                    cfg["image_size"]), jnp.float32)

    out = vit_forward(x, params)          # (2, 16, 32)
    jax.block_until_ready(out)
    assert out.shape == (2, 16, 32) and out.dtype == jnp.float32
    print("KERNEL_OK")
</pallas_src>

<mosaic_0001>
module attributes {stable_mosaic.version = 11 : i64} {
  func.func @_vit_kernel(%arg0: i32, %arg1: i32, %arg2: memref<1x16x64xbf16, #tpu.memory_space<vmem>>, %arg3: memref<64x32xbf16, #tpu.memory_space<vmem>>, %arg4: memref<1x32xf32, #tpu.memory_space<vmem>>, %arg5: memref<1x32xf32, #tpu.memory_space<vmem>>, %arg6: memref<1x32xf32, #tpu.memory_space<vmem>>, %arg7: memref<16x32xf32, #tpu.memory_space<vmem>>, %arg8: memref<1x1x32xf32, #tpu.memory_space<vmem>>, %arg9: memref<1x1x32xf32, #tpu.memory_space<vmem>>, %arg10: memref<1x32x96xbf16, #tpu.memory_space<vmem>>, %arg11: memref<1x1x96xf32, #tpu.memory_space<vmem>>, %arg12: memref<1x32x32xbf16, #tpu.memory_space<vmem>>, %arg13: memref<1x1x32xf32, #tpu.memory_space<vmem>>, %arg14: memref<1x1x32xf32, #tpu.memory_space<vmem>>, %arg15: memref<1x1x32xf32, #tpu.memory_space<vmem>>, %arg16: memref<1x32x16xbf16, #tpu.memory_space<vmem>>, %arg17: memref<1x1x16xf32, #tpu.memory_space<vmem>>, %arg18: memref<1x16x32xbf16, #tpu.memory_space<vmem>>, %arg19: memref<1x1x32xf32, #tpu.memory_space<vmem>>, %arg20: memref<1x32xf32, #tpu.memory_space<vmem>>, %arg21: memref<1x32xf32, #tpu.memory_space<vmem>>, %arg22: memref<1x16x32xf32, #tpu.memory_space<vmem>>) attributes {dimension_semantics = [#tpu.dimension_semantics<parallel>, #tpu.dimension_semantics<arbitrary>], iteration_bounds = array<i64: 2, 2>, scalar_prefetch = 0 : i64, scratch_operands = 0 : i64, tpu.core_type = #tpu.core_type<tc>, window_params = [{transform_indices = @transform_0, window_bounds = array<i64: 1, 16, 64>}, {pipeline_mode = #tpu.pipeline_mode<synchronous>, transform_indices = @transform_1, window_bounds = array<i64: 64, 32>}, {pipeline_mode = #tpu.pipeline_mode<synchronous>, transform_indices = @transform_2, window_bounds = array<i64: 1, 32>}, {pipeline_mode = #tpu.pipeline_mode<synchronous>, transform_indices = @transform_3, window_bounds = array<i64: 1, 32>}, {pipeline_mode = #tpu.pipeline_mode<synchronous>, transform_indices = @transform_4, window_bounds = array<i64: 1, 32>}, {pipeline_mode = #tpu.pipeline_mode<synchronous>, transform_indices = @transform_5, window_bounds = array<i64: 16, 32>}, {transform_indices = @transform_6, window_bounds = array<i64: 1, 1, 32>}, {transform_indices = @transform_7, window_bounds = array<i64: 1, 1, 32>}, {transform_indices = @transform_8, window_bounds = array<i64: 1, 32, 96>}, {transform_indices = @transform_9, window_bounds = array<i64: 1, 1, 96>}, {transform_indices = @transform_10, window_bounds = array<i64: 1, 32, 32>}, {transform_indices = @transform_11, window_bounds = array<i64: 1, 1, 32>}, {transform_indices = @transform_12, window_bounds = array<i64: 1, 1, 32>}, {transform_indices = @transform_13, window_bounds = array<i64: 1, 1, 32>}, {transform_indices = @transform_14, window_bounds = array<i64: 1, 32, 16>}, {transform_indices = @transform_15, window_bounds = array<i64: 1, 1, 16>}, {transform_indices = @transform_16, window_bounds = array<i64: 1, 16, 32>}, {transform_indices = @transform_17, window_bounds = array<i64: 1, 1, 32>}, {pipeline_mode = #tpu.pipeline_mode<synchronous>, transform_indices = @transform_18, window_bounds = array<i64: 1, 32>}, {pipeline_mode = #tpu.pipeline_mode<synchronous>, transform_indices = @transform_19, window_bounds = array<i64: 1, 32>}, {transform_indices = @transform_20, window_bounds = array<i64: 1, 16, 32>}]} {
    %c0_i32 = arith.constant 0 : i32
    %0 = arith.cmpi eq, %arg1, %c0_i32 : i32
    %1 = arith.extui %0 : i1 to i32
    %c0_i32_0 = arith.constant 0 : i32
    %2 = arith.cmpi ne, %1, %c0_i32_0 : i32
    scf.if %2 {
      %c0_65 = arith.constant 0 : index
      %c0_66 = arith.constant 0 : index
      %c0_67 = arith.constant 0 : index
      %164 = vector.load %arg2[%c0_65, %c0_66, %c0_67] : memref<1x16x64xbf16, #tpu.memory_space<vmem>>, vector<1x16x64xbf16>
      %165 = vector.shape_cast %164 : vector<1x16x64xbf16> to vector<16x64xbf16>
      %c0_68 = arith.constant 0 : index
      %c0_69 = arith.constant 0 : index
      %166 = vector.load %arg3[%c0_68, %c0_69] : memref<64x32xbf16, #tpu.memory_space<vmem>>, vector<64x32xbf16>
      %cst_70 = arith.constant dense<0.000000e+00> : vector<16x32xf32>
      %167 = tpu.matmul %165, %166, %cst_70 {dimension_numbers = #tpu.dot_dimension_numbers<[1], [0], [0], [1], [0, 0, 1, 1], [], []>} : vector<16x64xbf16>, vector<64x32xbf16>, vector<16x32xf32> -> vector<16x32xf32>
      %c0_71 = arith.constant 0 : index
      %c0_72 = arith.constant 0 : index
      %168 = vector.load %arg4[%c0_71, %c0_72] : memref<1x32xf32, #tpu.memory_space<vmem>>, vector<1x32xf32>
      %169 = vector.broadcast %168 : vector<1x32xf32> to vector<16x32xf32>
      %170 = arith.addf %167, %169 : vector<16x32xf32>
      %c0_73 = arith.constant 0 : index
      %c0_74 = arith.constant 0 : index
      %171 = vector.load %arg5[%c0_73, %c0_74] : memref<1x32xf32, #tpu.memory_space<vmem>>, vector<1x32xf32>
      %c0_75 = arith.constant 0 : index
      %c0_76 = arith.constant 0 : index
      %172 = vector.load %arg6[%c0_75, %c0_76] : memref<1x32xf32, #tpu.memory_space<vmem>>, vector<1x32xf32>
      %cst_77 = arith.constant dense<0.000000e+00> : vector<16xf32>
      %173 = vector.multi_reduction <add>, %170, %cst_77 [1] : vector<16x32xf32> to vector<16xf32>
      %174 = vector.shape_cast %173 : vector<16xf32> to vector<16x1xf32>
      %cst_78 = arith.constant 3.200000e+01 : f32
      %175 = vector.broadcast %cst_78 : f32 to vector<16x1xf32>
      %176 = arith.divf %174, %175 : vector<16x1xf32>
      %177 = vector.broadcast %176 : vector<16x1xf32> to vector<16x32xf32>
      %178 = arith.subf %170, %177 : vector<16x32xf32>
      %179 = arith.mulf %178, %178 : vector<16x32xf32>
      %cst_79 = arith.constant dense<0.000000e+00> : vector<16xf32>
      %180 = vector.multi_reduction <add>, %179, %cst_79 [1] : vector<16x32xf32> to vector<16xf32>
      %181 = vector.shape_cast %180 : vector<16xf32> to vector<16x1xf32>
      %cst_80 = arith.constant 3.200000e+01 : f32
      %182 = vector.broadcast %cst_80 : f32 to vector<16x1xf32>
      %183 = arith.divf %181, %182 : vector<16x1xf32>
      %184 = vector.broadcast %176 : vector<16x1xf32> to vector<16x32xf32>
      %185 = arith.subf %170, %184 : vector<16x32xf32>
      %cst_81 = arith.constant 9.99999997E-7 : f32
      %186 = vector.broadcast %cst_81 : f32 to vector<16x1xf32>
      %187 = arith.addf %183, %186 : vector<16x1xf32>
      %188 = math.rsqrt %187 : vector<16x1xf32>
      %189 = vector.broadcast %188 : vector<16x1xf32> to vector<16x32xf32>
      %190 = arith.mulf %185, %189 : vector<16x32xf32>
      %191 = vector.broadcast %171 : vector<1x32xf32> to vector<16x32xf32>
      %192 = arith.mulf %190, %191 : vector<16x32xf32>
      %193 = vector.broadcast %172 : vector<1x32xf32> to vector<16x32xf32>
      %194 = arith.addf %192, %193 : vector<16x32xf32>
      %c0_82 = arith.constant 0 : index
      %c0_83 = arith.constant 0 : index
      %195 = vector.load %arg7[%c0_82, %c0_83] : memref<16x32xf32, #tpu.memory_space<vmem>>, vector<16x32xf32>
      %196 = arith.addf %194, %195 : vector<16x32xf32>
      %c0_84 = arith.constant 0 : index
      %c0_85 = arith.constant 0 : index
      %c0_86 = arith.constant 0 : index
      %197 = vector.load %arg22[%c0_84, %c0_85, %c0_86] : memref<1x16x32xf32, #tpu.memory_space<vmem>>, vector<1x16x32xf32>
      %198 = vector.shape_cast %197 : vector<1x16x32xf32> to vector<16x32xf32>
      %199 = vector.shape_cast %196 : vector<16x32xf32> to vector<1x16x32xf32>
      tpu.vector_store %arg22[%c0_84, %c0_85, %c0_86], %199 {strides = array<i32>} : memref<1x16x32xf32, #tpu.memory_space<vmem>>, vector<1x16x32xf32>,
    } else {
    }
    %c0 = arith.constant 0 : index
    %c0_1 = arith.constant 0 : index
    %c0_2 = arith.constant 0 : index
    %3 = vector.load %arg22[%c0, %c0_1, %c0_2] : memref<1x16x32xf32, #tpu.memory_space<vmem>>, vector<1x16x32xf32>
    %4 = vector.shape_cast %3 : vector<1x16x32xf32> to vector<16x32xf32>
    %c0_3 = arith.constant 0 : index
    %c0_4 = arith.constant 0 : index
    %c0_5 = arith.constant 0 : index
    %5 = vector.load %arg8[%c0_3, %c0_4, %c0_5] : memref<1x1x32xf32, #tpu.memory_space<vmem>>, vector<1x1x32xf32>
    %6 = vector.shape_cast %5 : vector<1x1x32xf32> to vector<1x32xf32>
    %c0_6 = arith.constant 0 : index
    %c0_7 = arith.constant 0 : index
    %c0_8 = arith.constant 0 : index
    %7 = vector.load %arg9[%c0_6, %c0_7, %c0_8] : memref<1x1x32xf32, #tpu.memory_space<vmem>>, vector<1x1x32xf32>
    %8 = vector.shape_cast %7 : vector<1x1x32xf32> to vector<1x32xf32>
    %cst = arith.constant dense<0.000000e+00> : vector<16xf32>
    %9 = vector.multi_reduction <add>, %4, %cst [1] : vector<16x32xf32> to vector<16xf32>
    %10 = vector.shape_cast %9 : vector<16xf32> to vector<16x1xf32>
    %cst_9 = arith.constant 3.200000e+01 : f32
    %11 = vector.broadcast %cst_9 : f32 to vector<16x1xf32>
    %12 = arith.divf %10, %11 : vector<16x1xf32>
    %13 = vector.broadcast %12 : vector<16x1xf32> to vector<16x32xf32>
    %14 = arith.subf %4, %13 : vector<16x32xf32>
    %15 = arith.mulf %14, %14 : vector<16x32xf32>
    %cst_10 = arith.constant dense<0.000000e+00> : vector<16xf32>
    %16 = vector.multi_reduction <add>, %15, %cst_10 [1] : vector<16x32xf32> to vector<16xf32>
    %17 = vector.shape_cast %16 : vector<16xf32> to vector<16x1xf32>
    %cst_11 = arith.constant 3.200000e+01 : f32
    %18 = vector.broadcast %cst_11 : f32 to vector<16x1xf32>
    %19 = arith.divf %17, %18 : vector<16x1xf32>
    %20 = vector.broadcast %12 : vector<16x1xf32> to vector<16x32xf32>
    %21 = arith.subf %4, %20 : vector<16x32xf32>
    %cst_12 = arith.constant 9.99999997E-7 : f32
    %22 = vector.broadcast %cst_12 : f32 to vector<16x1xf32>
    %23 = arith.addf %19, %22 : vector<16x1xf32>
    %24 = math.rsqrt %23 : vector<16x1xf32>
    %25 = vector.broadcast %24 : vector<16x1xf32> to vector<16x32xf32>
    %26 = arith.mulf %21, %25 : vector<16x32xf32>
    %27 = vector.broadcast %6 : vector<1x32xf32> to vector<16x32xf32>
    %28 = arith.mulf %26, %27 : vector<16x32xf32>
    %29 = vector.broadcast %8 : vector<1x32xf32> to vector<16x32xf32>
    %30 = arith.addf %28, %29 : vector<16x32xf32>
    %31 = arith.truncf %30 : vector<16x32xf32> to vector<16x32xbf16>
    %c0_13 = arith.constant 0 : index
    %c0_14 = arith.constant 0 : index
    %c0_15 = arith.constant 0 : index
    %32 = vector.load %arg10[%c0_13, %c0_14, %c0_15] : memref<1x32x96xbf16, #tpu.memory_space<vmem>>, vector<1x32x96xbf16>
    %33 = vector.shape_cast %32 : vector<1x32x96xbf16> to vector<32x96xbf16>
    %cst_16 = arith.constant dense<0.000000e+00> : vector<16x96xf32>
    %34 = tpu.matmul %31, %33, %cst_16 {dimension_numbers = #tpu.dot_dimension_numbers<[1], [0], [0], [1], [0, 0, 1, 1], [], []>} : vector<16x32xbf16>, vector<32x96xbf16>, vector<16x96xf32> -> vector<16x96xf32>
    %c0_17 = arith.constant 0 : index
    %c0_18 = arith.constant 0 : index
    %c0_19 = arith.constant 0 : index
    %35 = vector.load %arg11[%c0_17, %c0_18, %c0_19] : memref<1x1x96xf32, #tpu.memory_space<vmem>>, vector<1x1x96xf32>
    %36 = vector.shape_cast %35 : vector<1x1x96xf32> to vector<1x96xf32>
    %37 = vector.broadcast %36 : vector<1x96xf32> to vector<16x96xf32>
    %38 = arith.addf %34, %37 : vector<16x96xf32>
    %39 = vector.extract_strided_slice %38 {offsets = [0, 0], sizes = [16, 8], strides = [1, 1]} : vector<16x96xf32> to vector<16x8xf32>
    %40 = vector.extract_strided_slice %38 {offsets = [0, 8], sizes = [16, 8], strides = [1, 1]} : vector<16x96xf32> to vector<16x8xf32>
    %41 = vector.extract_strided_slice %38 {offsets = [0, 16], sizes = [16, 8], strides = [1, 1]} : vector<16x96xf32> to vector<16x8xf32>
    %42 = vector.extract_strided_slice %38 {offsets = [0, 24], sizes = [16, 8], strides = [1, 1]} : vector<16x96xf32> to vector<16x8xf32>
    %43 = vector.shape_cast %39 : vector<16x8xf32> to vector<1x16x8xf32>
    %44 = vector.shape_cast %40 : vector<16x8xf32> to vector<1x16x8xf32>
    %45 = vector.shape_cast %41 : vector<16x8xf32> to vector<1x16x8xf32>
    %46 = vector.shape_cast %42 : vector<16x8xf32> to vector<1x16x8xf32>
    %47 = tpu.concatenate %43, %44, %45, %46 in 0 : vector<1x16x8xf32>, vector<1x16x8xf32>, vector<1x16x8xf32>, vector<1x16x8xf32> -> vector<4x16x8xf32>
    %48 = arith.truncf %47 : vector<4x16x8xf32> to vector<4x16x8xbf16>
    %49 = vector.extract_strided_slice %38 {offsets = [0, 32], sizes = [16, 8], strides = [1, 1]} : vector<16x96xf32> to vector<16x8xf32>
    %50 = vector.extract_strided_slice %38 {offsets = [0, 40], sizes = [16, 8], strides = [1, 1]} : vector<16x96xf32> to vector<16x8xf32>
    %51 = vector.extract_strided_slice %38 {offsets = [0, 48], sizes = [16, 8], strides = [1, 1]} : vector<16x96xf32> to vector<16x8xf32>
    %52 = vector.extract_strided_slice %38 {offsets = [0, 56], sizes = [16, 8], strides = [1, 1]} : vector<16x96xf32> to vector<16x8xf32>
    %53 = vector.shape_cast %49 : vector<16x8xf32> to vector<1x16x8xf32>
    %54 = vector.shape_cast %50 : vector<16x8xf32> to vector<1x16x8xf32>
    %55 = vector.shape_cast %51 : vector<16x8xf32> to vector<1x16x8xf32>
    %56 = vector.shape_cast %52 : vector<16x8xf32> to vector<1x16x8xf32>
    %57 = tpu.concatenate %53, %54, %55, %56 in 0 : vector<1x16x8xf32>, vector<1x16x8xf32>, vector<1x16x8xf32>, vector<1x16x8xf32> -> vector<4x16x8xf32>
    %58 = arith.truncf %57 : vector<4x16x8xf32> to vector<4x16x8xbf16>
    %59 = vector.extract_strided_slice %38 {offsets = [0, 64], sizes = [16, 8], strides = [1, 1]} : vector<16x96xf32> to vector<16x8xf32>
    %60 = vector.extract_strided_slice %38 {offsets = [0, 72], sizes = [16, 8], strides = [1, 1]} : vector<16x96xf32> to vector<16x8xf32>
    %61 = vector.extract_strided_slice %38 {offsets = [0, 80], sizes = [16, 8], strides = [1, 1]} : vector<16x96xf32> to vector<16x8xf32>
    %62 = vector.extract_strided_slice %38 {offsets = [0, 88], sizes = [16, 8], strides = [1, 1]} : vector<16x96xf32> to vector<16x8xf32>
    %63 = vector.shape_cast %59 : vector<16x8xf32> to vector<1x16x8xf32>
    %64 = vector.shape_cast %60 : vector<16x8xf32> to vector<1x16x8xf32>
    %65 = vector.shape_cast %61 : vector<16x8xf32> to vector<1x16x8xf32>
    %66 = vector.shape_cast %62 : vector<16x8xf32> to vector<1x16x8xf32>
    %67 = tpu.concatenate %63, %64, %65, %66 in 0 : vector<1x16x8xf32>, vector<1x16x8xf32>, vector<1x16x8xf32>, vector<1x16x8xf32> -> vector<4x16x8xf32>
    %68 = arith.truncf %67 : vector<4x16x8xf32> to vector<4x16x8xbf16>
    "tpu.trace_start"() <{level = 10 : i32, message = "hnd,hmd->hnm"}> : () -> ()
    %cst_20 = arith.constant dense<0.000000e+00> : vector<4x16x16xf32>
    %69 = tpu.matmul %48, %58, %cst_20 {dimension_numbers = #tpu.dot_dimension_numbers<[2], [2], [1], [1], [0, 0, 0, 1, 1, 1], [0], [0]>} : vector<4x16x8xbf16>, vector<4x16x8xbf16>, vector<4x16x16xf32> -> vector<4x16x16xf32>
    "tpu.trace_stop"() : () -> ()
    %cst_21 = arith.constant 2.82842708 : f32
    %70 = vector.broadcast %cst_21 : f32 to vector<4x16x16xf32>
    %71 = arith.mulf %69, %70 : vector<4x16x16xf32>
    %cst_22 = arith.constant dense<0xFF800000> : vector<4x16xf32>
    %72 = vector.multi_reduction <maximumf>, %71, %cst_22 [2] : vector<4x16x16xf32> to vector<4x16xf32>
    %73 = vector.shape_cast %72 : vector<4x16xf32> to vector<4x16x1xf32>
    %74 = vector.broadcast %73 : vector<4x16x1xf32> to vector<4x16x16xf32>
    %75 = arith.subf %71, %74 : vector<4x16x16xf32>
    %76 = math.exp %75 : vector<4x16x16xf32>
    %cst_23 = arith.constant dense<0.000000e+00> : vector<4x16xf32>
    %77 = vector.multi_reduction <add>, %76, %cst_23 [2] : vector<4x16x16xf32> to vector<4x16xf32>
    %78 = vector.shape_cast %77 : vector<4x16xf32> to vector<4x16x1xf32>
    %79 = arith.truncf %76 : vector<4x16x16xf32> to vector<4x16x16xbf16>
    "tpu.trace_start"() <{level = 10 : i32, message = "hnm,hmd->hnd"}> : () -> ()
    %cst_24 = arith.constant dense<0.000000e+00> : vector<4x16x8xf32>
    %80 = tpu.matmul %79, %68, %cst_24 {dimension_numbers = #tpu.dot_dimension_numbers<[2], [1], [1], [2], [0, 0, 0, 1, 1, 2], [0], [0]>} : vector<4x16x16xbf16>, vector<4x16x8xbf16>, vector<4x16x8xf32> -> vector<4x16x8xf32>
    "tpu.trace_stop"() : () -> ()
    %81 = tpu.reciprocal %78 {approx = true} : vector<4x16x1xf32> -> vector<4x16x1xf32>
    %82 = vector.broadcast %81 : vector<4x16x1xf32> to vector<4x16x8xf32>
    %83 = arith.mulf %80, %82 : vector<4x16x8xf32>
    %84 = vector.extract_strided_slice %83 {offsets = [0, 0, 0], sizes = [1, 16, 8], strides = [1, 1, 1]} : vector<4x16x8xf32> to vector<1x16x8xf32>
    %85 = vector.shape_cast %84 : vector<1x16x8xf32> to vector<16x8xf32>
    %86 = vector.extract_strided_slice %83 {offsets = [1, 0, 0], sizes = [1, 16, 8], strides = [1, 1, 1]} : vector<4x16x8xf32> to vector<1x16x8xf32>
    %87 = vector.shape_cast %86 : vector<1x16x8xf32> to vector<16x8xf32>
    %88 = vector.extract_strided_slice %83 {offsets = [2, 0, 0], sizes = [1, 16, 8], strides = [1, 1, 1]} : vector<4x16x8xf32> to vector<1x16x8xf32>
    %89 = vector.shape_cast %88 : vector<1x16x8xf32> to vector<16x8xf32>
    %90 = vector.extract_strided_slice %83 {offsets = [3, 0, 0], sizes = [1, 16, 8], strides = [1, 1, 1]} : vector<4x16x8xf32> to vector<1x16x8xf32>
    %91 = vector.shape_cast %90 : vector<1x16x8xf32> to vector<16x8xf32>
    %92 = tpu.concatenate %85, %87, %89, %91 in 1 : vector<16x8xf32>, vector<16x8xf32>, vector<16x8xf32>, vector<16x8xf32> -> vector<16x32xf32>
    %93 = arith.truncf %92 : vector<16x32xf32> to vector<16x32xbf16>
    %c0_25 = arith.constant 0 : index
    %c0_26 = arith.constant 0 : index
    %c0_27 = arith.constant 0 : index
    %94 = vector.load %arg12[%c0_25, %c0_26, %c0_27] : memref<1x32x32xbf16, #tpu.memory_space<vmem>>, vector<1x32x32xbf16>
    %95 = vector.shape_cast %94 : vector<1x32x32xbf16> to vector<32x32xbf16>
    %cst_28 = arith.constant dense<0.000000e+00> : vector<16x32xf32>
    %96 = tpu.matmul %93, %95, %cst_28 {dimension_numbers = #tpu.dot_dimension_numbers<[1], [0], [0], [1], [0, 0, 1, 1], [], []>} : vector<16x32xbf16>, vector<32x32xbf16>, vector<16x32xf32> -> vector<16x32xf32>
    %c0_29 = arith.constant 0 : index
    %c0_30 = arith.constant 0 : index
    %c0_31 = arith.constant 0 : index
    %97 = vector.load %arg13[%c0_29, %c0_30, %c0_31] : memref<1x1x32xf32, #tpu.memory_space<vmem>>, vector<1x1x32xf32>
    %98 = vector.shape_cast %97 : vector<1x1x32xf32> to vector<1x32xf32>
    %99 = vector.broadcast %98 : vector<1x32xf32> to vector<16x32xf32>
    %100 = arith.addf %96, %99 : vector<16x32xf32>
    %101 = arith.addf %4, %100 : vector<16x32xf32>
    %c0_32 = arith.constant 0 : index
    %c0_33 = arith.constant 0 : index
    %c0_34 = arith.constant 0 : index
    %102 = vector.load %arg14[%c0_32, %c0_33, %c0_34] : memref<1x1x32xf32, #tpu.memory_space<vmem>>, vector<1x1x32xf32>
    %103 = vector.shape_cast %102 : vector<1x1x32xf32> to vector<1x32xf32>
    %c0_35 = arith.constant 0 : index
    %c0_36 = arith.constant 0 : index
    %c0_37 = arith.constant 0 : index
    %104 = vector.load %arg15[%c0_35, %c0_36, %c0_37] : memref<1x1x32xf32, #tpu.memory_space<vmem>>, vector<1x1x32xf32>
    %105 = vector.shape_cast %104 : vector<1x1x32xf32> to vector<1x32xf32>
    %cst_38 = arith.constant dense<0.000000e+00> : vector<16xf32>
    %106 = vector.multi_reduction <add>, %101, %cst_38 [1] : vector<16x32xf32> to vector<16xf32>
    %107 = vector.shape_cast %106 : vector<16xf32> to vector<16x1xf32>
    %cst_39 = arith.constant 3.200000e+01 : f32
    %108 = vector.broadcast %cst_39 : f32 to vector<16x1xf32>
    %109 = arith.divf %107, %108 : vector<16x1xf32>
    %110 = vector.broadcast %109 : vector<16x1xf32> to vector<16x32xf32>
    %111 = arith.subf %101, %110 : vector<16x32xf32>
    %112 = arith.mulf %111, %111 : vector<16x32xf32>
    %cst_40 = arith.constant dense<0.000000e+00> : vector<16xf32>
    %113 = vector.multi_reduction <add>, %112, %cst_40 [1] : vector<16x32xf32> to vector<16xf32>
    %114 = vector.shape_cast %113 : vector<16xf32> to vector<16x1xf32>
    %cst_41 = arith.constant 3.200000e+01 : f32
    %115 = vector.broadcast %cst_41 : f32 to vector<16x1xf32>
    %116 = arith.divf %114, %115 : vector<16x1xf32>
    %117 = vector.broadcast %109 : vector<16x1xf32> to vector<16x32xf32>
    %118 = arith.subf %101, %117 : vector<16x32xf32>
    %cst_42 = arith.constant 9.99999997E-7 : f32
    %119 = vector.broadcast %cst_42 : f32 to vector<16x1xf32>
    %120 = arith.addf %116, %119 : vector<16x1xf32>
    %121 = math.rsqrt %120 : vector<16x1xf32>
    %122 = vector.broadcast %121 : vector<16x1xf32> to vector<16x32xf32>
    %123 = arith.mulf %118, %122 : vector<16x32xf32>
    %124 = vector.broadcast %103 : vector<1x32xf32> to vector<16x32xf32>
    %125 = arith.mulf %123, %124 : vector<16x32xf32>
    %126 = vector.broadcast %105 : vector<1x32xf32> to vector<16x32xf32>
    %127 = arith.addf %125, %126 : vector<16x32xf32>
    %128 = arith.truncf %127 : vector<16x32xf32> to vector<16x32xbf16>
    %c0_43 = arith.constant 0 : index
    %c0_44 = arith.constant 0 : index
    %c0_45 = arith.constant 0 : index
    %129 = vector.load %arg16[%c0_43, %c0_44, %c0_45] : memref<1x32x16xbf16, #tpu.memory_space<vmem>>, vector<1x32x16xbf16>
    %130 = vector.shape_cast %129 : vector<1x32x16xbf16> to vector<32x16xbf16>
    %cst_46 = arith.constant dense<0.000000e+00> : vector<16x16xf32>
    %131 = tpu.matmul %128, %130, %cst_46 {dimension_numbers = #tpu.dot_dimension_numbers<[1], [0], [0], [1], [0, 0, 1, 1], [], []>} : vector<16x32xbf16>, vector<32x16xbf16>, vector<16x16xf32> -> vector<16x16xf32>
    %c0_47 = arith.constant 0 : index
    %c0_48 = arith.constant 0 : index
    %c0_49 = arith.constant 0 : index
    %132 = vector.load %arg17[%c0_47, %c0_48, %c0_49] : memref<1x1x16xf32, #tpu.memory_space<vmem>>, vector<1x1x16xf32>
    %133 = vector.shape_cast %132 : vector<1x1x16xf32> to vector<1x16xf32>
    %134 = vector.broadcast %133 : vector<1x16xf32> to vector<16x16xf32>
    %135 = arith.addf %131, %134 : vector<16x16xf32>
    %cst_50 = arith.constant 5.000000e-01 : f32
    %136 = vector.broadcast %cst_50 : f32 to vector<16x16xf32>
    %137 = arith.mulf %136, %135 : vector<16x16xf32>
    %cst_51 = arith.constant 4.471500e-02 : f32
    %138 = vector.broadcast %cst_51 : f32 to vector<16x16xf32>
    %139 = arith.mulf %138, %135 : vector<16x16xf32>
    %140 = arith.mulf %139, %135 : vector<16x16xf32>
    %141 = arith.mulf %140, %135 : vector<16x16xf32>
    %142 = arith.addf %135, %141 : vector<16x16xf32>
    %cst_52 = arith.constant 0.797884583 : f32
    %143 = vector.broadcast %cst_52 : f32 to vector<16x16xf32>
    %144 = arith.mulf %143, %142 : vector<16x16xf32>
    %145 = math.tanh %144 : vector<16x16xf32>
    %cst_53 = arith.constant 1.000000e+00 : f32
    %146 = vector.broadcast %cst_53 : f32 to vector<16x16xf32>
    %147 = arith.addf %146, %145 : vector<16x16xf32>
    %148 = arith.mulf %137, %147 : vector<16x16xf32>
    %149 = arith.truncf %148 : vector<16x16xf32> to vector<16x16xbf16>
    %c0_54 = arith.constant 0 : index
    %c0_55 = arith.constant 0 : index
    %c0_56 = arith.constant 0 : index
    %150 = vector.load %arg18[%c0_54, %c0_55, %c0_56] : memref<1x16x32xbf16, #tpu.memory_space<vmem>>, vector<1x16x32xbf16>
    %151 = vector.shape_cast %150 : vector<1x16x32xbf16> to vector<16x32xbf16>
    %cst_57 = arith.constant dense<0.000000e+00> : vector<16x32xf32>
    %152 = tpu.matmul %149, %151, %cst_57 {dimension_numbers = #tpu.dot_dimension_numbers<[1], [0], [0], [1], [0, 0, 1, 1], [], []>} : vector<16x16xbf16>, vector<16x32xbf16>, vector<16x32xf32> -> vector<16x32xf32>
    %c0_58 = arith.constant 0 : index
    %c0_59 = arith.constant 0 : index
    %c0_60 = arith.constant 0 : index
    %153 = vector.load %arg19[%c0_58, %c0_59, %c0_60] : memref<1x1x32xf32, #tpu.memory_space<vmem>>, vector<1x1x32xf32>
    %154 = vector.shape_cast %153 : vector<1x1x32xf32> to vector<1x32xf32>
    %155 = vector.broadcast %154 : vector<1x32xf32> to vector<16x32xf32>
    %156 = arith.addf %152, %155 : vector<16x32xf32>
    %157 = arith.addf %101, %156 : vector<16x32xf32>
    %c0_61 = arith.constant 0 : index
    %c0_62 = arith.constant 0 : index
    %c0_63 = arith.constant 0 : index
    %158 = vector.load %arg22[%c0_61, %c0_62, %c0_63] : memref<1x16x32xf32, #tpu.memory_space<vmem>>, vector<1x16x32xf32>
    %159 = vector.shape_cast %158 : vector<1x16x32xf32> to vector<16x32xf32>
    %160 = vector.shape_cast %157 : vector<16x32xf32> to vector<1x16x32xf32>
    tpu.vector_store %arg22[%c0_61, %c0_62, %c0_63], %160 {strides = array<i32>} : memref<1x16x32xf32, #tpu.memory_space<vmem>>, vector<1x16x32xf32>,
    %c1_i32 = arith.constant 1 : i32
    %161 = arith.cmpi eq, %arg1, %c1_i32 : i32
    %162 = arith.extui %161 : i1 to i32
    %c0_i32_64 = arith.constant 0 : i32
    %163 = arith.cmpi ne, %162, %c0_i32_64 : i32
    scf.if %163 {
      %c0_65 = arith.constant 0 : index
      %c0_66 = arith.constant 0 : index
      %c0_67 = arith.constant 0 : index
      %164 = vector.load %arg22[%c0_65, %c0_66, %c0_67] : memref<1x16x32xf32, #tpu.memory_space<vmem>>, vector<1x16x32xf32>
      %165 = vector.shape_cast %164 : vector<1x16x32xf32> to vector<16x32xf32>
      %c0_68 = arith.constant 0 : index
      %c0_69 = arith.constant 0 : index
      %166 = vector.load %arg20[%c0_68, %c0_69] : memref<1x32xf32, #tpu.memory_space<vmem>>, vector<1x32xf32>
      %c0_70 = arith.constant 0 : index
      %c0_71 = arith.constant 0 : index
      %167 = vector.load %arg21[%c0_70, %c0_71] : memref<1x32xf32, #tpu.memory_space<vmem>>, vector<1x32xf32>
      %cst_72 = arith.constant dense<0.000000e+00> : vector<16xf32>
      %168 = vector.multi_reduction <add>, %165, %cst_72 [1] : vector<16x32xf32> to vector<16xf32>
      %169 = vector.shape_cast %168 : vector<16xf32> to vector<16x1xf32>
      %cst_73 = arith.constant 3.200000e+01 : f32
      %170 = vector.broadcast %cst_73 : f32 to vector<16x1xf32>
      %171 = arith.divf %169, %170 : vector<16x1xf32>
      %172 = vector.broadcast %171 : vector<16x1xf32> to vector<16x32xf32>
      %173 = arith.subf %165, %172 : vector<16x32xf32>
      %174 = arith.mulf %173, %173 : vector<16x32xf32>
      %cst_74 = arith.constant dense<0.000000e+00> : vector<16xf32>
      %175 = vector.multi_reduction <add>, %174, %cst_74 [1] : vector<16x32xf32> to vector<16xf32>
      %176 = vector.shape_cast %175 : vector<16xf32> to vector<16x1xf32>
      %cst_75 = arith.constant 3.200000e+01 : f32
      %177 = vector.broadcast %cst_75 : f32 to vector<16x1xf32>
      %178 = arith.divf %176, %177 : vector<16x1xf32>
      %179 = vector.broadcast %171 : vector<16x1xf32> to vector<16x32xf32>
      %180 = arith.subf %165, %179 : vector<16x32xf32>
      %cst_76 = arith.constant 9.99999997E-7 : f32
      %181 = vector.broadcast %cst_76 : f32 to vector<16x1xf32>
      %182 = arith.addf %178, %181 : vector<16x1xf32>
      %183 = math.rsqrt %182 : vector<16x1xf32>
      %184 = vector.broadcast %183 : vector<16x1xf32> to vector<16x32xf32>
      %185 = arith.mulf %180, %184 : vector<16x32xf32>
      %186 = vector.broadcast %166 : vector<1x32xf32> to vector<16x32xf32>
      %187 = arith.mulf %185, %186 : vector<16x32xf32>
      %188 = vector.broadcast %167 : vector<1x32xf32> to vector<16x32xf32>
      %189 = arith.addf %187, %188 : vector<16x32xf32>
      %c0_77 = arith.constant 0 : index
      %c0_78 = arith.constant 0 : index
      %c0_79 = arith.constant 0 : index
      %190 = vector.load %arg22[%c0_77, %c0_78, %c0_79] : memref<1x16x32xf32, #tpu.memory_space<vmem>>, vector<1x16x32xf32>
      %191 = vector.shape_cast %190 : vector<1x16x32xf32> to vector<16x32xf32>
      %192 = vector.shape_cast %189 : vector<16x32xf32> to vector<1x16x32xf32>
      tpu.vector_store %arg22[%c0_77, %c0_78, %c0_79], %192 {strides = array<i32>} : memref<1x16x32xf32, #tpu.memory_space<vmem>>, vector<1x16x32xf32>,
    } else {
    }
    return
  }
  func.func @transform_0(%arg0: i32, %arg1: i32) -> (i32, i32, i32) {
    %c0_i32 = arith.constant 0 : i32
    %c0_i32_0 = arith.constant 0 : i32
    %c0_i32_1 = arith.constant 0 : i32
    return %arg0, %c0_i32, %c0_i32_0 : i32, i32, i32
  }
  func.func @transform_1(%arg0: i32, %arg1: i32) -> (i32, i32) {
    %c0_i32 = arith.constant 0 : i32
    %c0_i32_0 = arith.constant 0 : i32
    %c0_i32_1 = arith.constant 0 : i32
    return %c0_i32, %c0_i32_0 : i32, i32
  }
  func.func @transform_2(%arg0: i32, %arg1: i32) -> (i32, i32) {
    %c0_i32 = arith.constant 0 : i32
    %c0_i32_0 = arith.constant 0 : i32
    %c0_i32_1 = arith.constant 0 : i32
    return %c0_i32, %c0_i32_0 : i32, i32
  }
  func.func @transform_3(%arg0: i32, %arg1: i32) -> (i32, i32) {
    %c0_i32 = arith.constant 0 : i32
    %c0_i32_0 = arith.constant 0 : i32
    %c0_i32_1 = arith.constant 0 : i32
    return %c0_i32, %c0_i32_0 : i32, i32
  }
  func.func @transform_4(%arg0: i32, %arg1: i32) -> (i32, i32) {
    %c0_i32 = arith.constant 0 : i32
    %c0_i32_0 = arith.constant 0 : i32
    %c0_i32_1 = arith.constant 0 : i32
    return %c0_i32, %c0_i32_0 : i32, i32
  }
  func.func @transform_5(%arg0: i32, %arg1: i32) -> (i32, i32) {
    %c0_i32 = arith.constant 0 : i32
    %c0_i32_0 = arith.constant 0 : i32
    %c0_i32_1 = arith.constant 0 : i32
    return %c0_i32, %c0_i32_0 : i32, i32
  }
  func.func @transform_6(%arg0: i32, %arg1: i32) -> (i32, i32, i32) {
    %c0_i32 = arith.constant 0 : i32
    %c0_i32_0 = arith.constant 0 : i32
    %c0_i32_1 = arith.constant 0 : i32
    return %arg1, %c0_i32, %c0_i32_0 : i32, i32, i32
  }
  func.func @transform_7(%arg0: i32, %arg1: i32) -> (i32, i32, i32) {
    %c0_i32 = arith.constant 0 : i32
    %c0_i32_0 = arith.constant 0 : i32
    %c0_i32_1 = arith.constant 0 : i32
    return %arg1, %c0_i32, %c0_i32_0 : i32, i32, i32
  }
  func.func @transform_8(%arg0: i32, %arg1: i32) -> (i32, i32, i32) {
    %c0_i32 = arith.constant 0 : i32
    %c0_i32_0 = arith.constant 0 : i32
    %c0_i32_1 = arith.constant 0 : i32
    return %arg1, %c0_i32, %c0_i32_0 : i32, i32, i32
  }
  func.func @transform_9(%arg0: i32, %arg1: i32) -> (i32, i32, i32) {
    %c0_i32 = arith.constant 0 : i32
    %c0_i32_0 = arith.constant 0 : i32
    %c0_i32_1 = arith.constant 0 : i32
    return %arg1, %c0_i32, %c0_i32_0 : i32, i32, i32
  }
  func.func @transform_10(%arg0: i32, %arg1: i32) -> (i32, i32, i32) {
    %c0_i32 = arith.constant 0 : i32
    %c0_i32_0 = arith.constant 0 : i32
    %c0_i32_1 = arith.constant 0 : i32
    return %arg1, %c0_i32, %c0_i32_0 : i32, i32, i32
  }
  func.func @transform_11(%arg0: i32, %arg1: i32) -> (i32, i32, i32) {
    %c0_i32 = arith.constant 0 : i32
    %c0_i32_0 = arith.constant 0 : i32
    %c0_i32_1 = arith.constant 0 : i32
    return %arg1, %c0_i32, %c0_i32_0 : i32, i32, i32
  }
  func.func @transform_12(%arg0: i32, %arg1: i32) -> (i32, i32, i32) {
    %c0_i32 = arith.constant 0 : i32
    %c0_i32_0 = arith.constant 0 : i32
    %c0_i32_1 = arith.constant 0 : i32
    return %arg1, %c0_i32, %c0_i32_0 : i32, i32, i32
  }
  func.func @transform_13(%arg0: i32, %arg1: i32) -> (i32, i32, i32) {
    %c0_i32 = arith.constant 0 : i32
    %c0_i32_0 = arith.constant 0 : i32
    %c0_i32_1 = arith.constant 0 : i32
    return %arg1, %c0_i32, %c0_i32_0 : i32, i32, i32
  }
  func.func @transform_14(%arg0: i32, %arg1: i32) -> (i32, i32, i32) {
    %c0_i32 = arith.constant 0 : i32
    %c0_i32_0 = arith.constant 0 : i32
    %c0_i32_1 = arith.constant 0 : i32
    return %arg1, %c0_i32, %c0_i32_0 : i32, i32, i32
  }
  func.func @transform_15(%arg0: i32, %arg1: i32) -> (i32, i32, i32) {
    %c0_i32 = arith.constant 0 : i32
    %c0_i32_0 = arith.constant 0 : i32
    %c0_i32_1 = arith.constant 0 : i32
    return %arg1, %c0_i32, %c0_i32_0 : i32, i32, i32
  }
  func.func @transform_16(%arg0: i32, %arg1: i32) -> (i32, i32, i32) {
    %c0_i32 = arith.constant 0 : i32
    %c0_i32_0 = arith.constant 0 : i32
    %c0_i32_1 = arith.constant 0 : i32
    return %arg1, %c0_i32, %c0_i32_0 : i32, i32, i32
  }
  func.func @transform_17(%arg0: i32, %arg1: i32) -> (i32, i32, i32) {
    %c0_i32 = arith.constant 0 : i32
    %c0_i32_0 = arith.constant 0 : i32
    %c0_i32_1 = arith.constant 0 : i32
    return %arg1, %c0_i32, %c0_i32_0 : i32, i32, i32
  }
  func.func @transform_18(%arg0: i32, %arg1: i32) -> (i32, i32) {
    %c0_i32 = arith.constant 0 : i32
    %c0_i32_0 = arith.constant 0 : i32
    %c0_i32_1 = arith.constant 0 : i32
    return %c0_i32, %c0_i32_0 : i32, i32
  }
  func.func @transform_19(%arg0: i32, %arg1: i32) -> (i32, i32) {
    %c0_i32 = arith.constant 0 : i32
    %c0_i32_0 = arith.constant 0 : i32
    %c0_i32_1 = arith.constant 0 : i32
    return %c0_i32, %c0_i32_0 : i32, i32
  }
  func.func @transform_20(%arg0: i32, %arg1: i32) -> (i32, i32, i32) {
    %c0_i32 = arith.constant 0 : i32
    %c0_i32_0 = arith.constant 0 : i32
    %c0_i32_1 = arith.constant 0 : i32
    return %arg0, %c0_i32, %c0_i32_0 : i32, i32, i32
  }
}

</mosaic_0001>

<llo_original>
// kernel: tpu_custom_call.1
$region0: #{tpu_custom_call.1}
  #allocation0 [shape = 'u32[]', space=smem, size = 0x4, offset = 0x4, fixed_abs, tag = 'smem constant byte address 0x4 - core index']
  #allocation1 [shape = 'u32[144,128]{1,0:T(1,128)}', space=vmem, size = 0x12000, scoped, tag = 'internal scratch']
  %s0 = inlined_call_operand.vmem [shape: bf16[2,16,64], index: 0, kind: input, shape index: {}]
  %s1 = inlined_call_operand.vmem [shape: bf16[64,32], index: 1, kind: input, shape index: {}]
  %s2 = inlined_call_operand.hbm [shape: f32[1,32], index: 2, kind: input, shape index: {}]
  %s3 = inlined_call_operand.hbm [shape: f32[1,32], index: 3, kind: input, shape index: {}]
  %s4 = inlined_call_operand.hbm [shape: f32[1,32], index: 4, kind: input, shape index: {}]
  %s5 = inlined_call_operand.vmem [shape: f32[16,32], index: 5, kind: input, shape index: {}]
  %s6 = inlined_call_operand.vmem [shape: f32[2,1,32], index: 6, kind: input, shape index: {}]
  %s7 = inlined_call_operand.hbm [shape: f32[2,1,32], index: 7, kind: input, shape index: {}]
  %s8 = inlined_call_operand.vmem [shape: bf16[2,32,96], index: 8, kind: input, shape index: {}]
  %s9 = inlined_call_operand.hbm [shape: f32[2,1,96], index: 9, kind: input, shape index: {}]
  %s10 = inlined_call_operand.vmem [shape: bf16[2,32,32], index: 10, kind: input, shape index: {}]
  %s11 = inlined_call_operand.vmem [shape: f32[2,1,32], index: 11, kind: input, shape index: {}]
  %s12 = inlined_call_operand.vmem [shape: f32[2,1,32], index: 12, kind: input, shape index: {}]
  %s13 = inlined_call_operand.vmem [shape: f32[2,1,32], index: 13, kind: input, shape index: {}]
  %s14 = inlined_call_operand.vmem [shape: bf16[2,32,16], index: 14, kind: input, shape index: {}]
  %s15 = inlined_call_operand.vmem [shape: f32[2,1,16], index: 15, kind: input, shape index: {}]
  %s16 = inlined_call_operand.vmem [shape: bf16[2,16,32], index: 16, kind: input, shape index: {}]
  %s17 = inlined_call_operand.vmem [shape: f32[2,1,32], index: 17, kind: input, shape index: {}]
  %s18 = inlined_call_operand.vmem [shape: f32[1,32], index: 18, kind: input, shape index: {}]
  %s19 = inlined_call_operand.vmem [shape: f32[1,32], index: 19, kind: input, shape index: {}]
  %s20 = inlined_call_operand.hbm [shape: f32[2,16,32], index: 20, kind: output, shape index: {}]
  %s21 = sld [smem:[#allocation0]]
  $region141: #{tpu_custom_call.1} parent=0
    _
  %s23 = ssub.s32 1, %s21
  %s24 = scalar_select 0, %s23, %s21
  $region1: #{tpu_custom_call.1} parent=0
    #allocation2 [shape = 'u8[512]{0}', space=vmem, size = 0x400, scoped, tag = 'input window, operand 2, single buffered']
    #allocation3 [shape = 's32[2]{0}', space=sflag, size = 0x8, scoped, tag = 'scoped memory for tpu_custom_call.1']
    #allocation4 [shape = 's32[2]{0}', space=sflag, size = 0x8, scoped, tag = 'scoped memory for tpu_custom_call.1']
    #allocation5 [shape = 'u8[512]{0}', space=vmem, size = 0x400, scoped, tag = 'input window, operand 3, single buffered']
    #allocation6 [shape = 's32[1]{0}', space=sflag, size = 0x4, scoped, tag = 'scoped memory for tpu_custom_call.1']
    #allocation7 [shape = 'u8[512]{0}', space=vmem, size = 0x400, scoped, tag = 'input window, operand 4, single buffered']
    #allocation8 [shape = 'u8[1024]{0}', space=vmem, size = 0x400, scoped, tag = 'input window, operand 7']
    #allocation9 [shape = 's32[2]{0}', space=sflag, size = 0x8, scoped, tag = 'scoped memory for tpu_custom_call.1']
    #allocation10 [shape = 'u8[1024]{0}', space=vmem, size = 0x400, scoped, tag = 'input window, operand 9']
    #allocation11 [shape = 'u8[16384]{0}', space=vmem, size = 0x4000, scoped, tag = 'output window, operand 0']
    %25 = vsyncpa [#allocation3], 0
    %26 = vsyncpa [#allocation6], 0
    %27 = vsyncpa [#allocation9], 0
    %s28 = scalar_lea.sflag [#allocation9], 1
    %29 = vsyncpa %s28, 0
    %30 = vsyncpa [#allocation4], 0
    %s31 = scalar_lea.sflag [#allocation4], 1
    %32 = vsyncpa %s31, 0
    loop: start=0, step=1, limit=6
    $region2: #{tpu_custom_call.1} parent=1 // loop_pre_header
      _
    $region3: #{tpu_custom_call.1} parent=1 // loop_header
      %s34 = sphi 0, %s38
      %p35 = scmp.ge.s32.totalorder %s34, 6
      %s41 = sphi 0, %s53
      %s42 = sphi 0, %s49
      %s43 = sphi 0, %s41
      %s44 = sphi 0, %s42
      %s45 = sphi 0, %s43
      %s46 = sphi 0, %s44
      %s56 = sphi 0, %s58
      %s59 = sphi 0, %s56
      %s60 = sphi 0, %s59
      %s76 = sphi 0, %s60
      %s80 = sphi 0, %s80
      %s82 = sphi 0, %s80
      %s83 = sphi 0, %s82
      %s97 = sphi 0, %s83
      %s101 = sphi 0, %s101
      %s103 = sphi 0, %s101
      %s104 = sphi 0, %s103
      %s118 = sphi 0, %s104
      %s122 = sphi 0, %s122
      %s124 = sphi 0, %s122
      %s125 = sphi 0, %s124
      %s139 = sphi 0, %s125
      %s143 = sphi 0, %s143
      %s145 = sphi 0, %s143
      %s146 = sphi 0, %s145
      %s160 = sphi 0, %s146
      %s164 = sphi 0, %s164
      %s166 = sphi 0, %s164
      %s167 = sphi 0, %s166
      %s181 = sphi 0, %s167
      %s187 = sphi 0, %s189
      %s190 = sphi 0, %s187
      %s191 = sphi 0, %s190
      %s207 = sphi 0, %s191
      %s213 = sphi 0, %s215
      %s216 = sphi 0, %s213
      %s217 = sphi 0, %s216
      %s233 = sphi 0, %s217
      %s239 = sphi 0, %s241
      %s242 = sphi 0, %s239
      %s243 = sphi 0, %s242
      %s259 = sphi 0, %s243
      %s265 = sphi 0, %s267
      %s268 = sphi 0, %s265
      %s269 = sphi 0, %s268
      %s285 = sphi 0, %s269
      %s291 = sphi 0, %s293
      %s294 = sphi 0, %s291
      %s295 = sphi 0, %s294
      %s311 = sphi 0, %s295
      %s317 = sphi 0, %s319
      %s320 = sphi 0, %s317
      %s321 = sphi 0, %s320
      %s337 = sphi 0, %s321
      %s343 = sphi 0, %s345
      %s346 = sphi 0, %s343
      %s347 = sphi 0, %s346
      %s363 = sphi 0, %s347
      %s369 = sphi 0, %s371
      %s372 = sphi 0, %s369
      %s373 = sphi 0, %s372
      %s389 = sphi 0, %s373
      %s395 = sphi 0, %s397
      %s398 = sphi 0, %s395
      %s399 = sphi 0, %s398
      %s415 = sphi 0, %s399
      %s421 = sphi 0, %s423
      %s424 = sphi 0, %s421
      %s425 = sphi 0, %s424
      %s441 = sphi 0, %s425
      %s447 = sphi 0, %s449
      %s450 = sphi 0, %s447
      %s451 = sphi 0, %s450
      %s467 = sphi 0, %s451
      %s473 = sphi 0, %s475
      %s476 = sphi 0, %s473
      %s477 = sphi 0, %s476
      %s493 = sphi 0, %s477
      %s497 = sphi 0, %s497
      %s499 = sphi 0, %s497
      %s500 = sphi 0, %s499
      %s514 = sphi 0, %s500
      %s518 = sphi 0, %s518
      %s520 = sphi 0, %s518
      %s521 = sphi 0, %s520
      %s535 = sphi 0, %s521
      %s541 = sphi 0, %s543
      %s544 = sphi 0, %s541
      %s545 = sphi 0, %s544
      %s561 = sphi 0, %s545
    $region4: #{tpu_custom_call.1} parent=1 // loop_header_branch
      %37 = sbr.rel (%p35) target = $region8
    $region5: #{tpu_custom_call.1} parent=1 // loop_body
      %s39 = ssub.s32 %s34, 1
      %s40 = ssub.s32 %s34, 2
      %s47 = sadd.s32 1, %s42
      %p48 = scmp.ge.s32.totalorder %s47, 2
      %s49 = scalar_select %p48, 0, %s47
      %s50 = sadd.s32 1, %s41
      %s51 = scalar_select %p48, %s50, %s41
      %p52 = scmp.ge.s32.totalorder %s51, 2
      %s53 = scalar_select %p52, 0, %s51
      %s54 = ssub.s32 %s41, %s53
      %p55 = scmp.eq.s32.totalorder %s54, 0
      %s57 = sadd.s32 %s56, 1
      %s58 = scalar_select %p55, %s56, %s57
      %p61 = pneg %p55
      %p62 = scmp.eq.s32.totalorder %s34, 3
      %p63 = por %p61, %p62
      %p64 = scmp.ne.s32.totalorder %s56, %s59
      %p65 = scmp.eq.s32.totalorder %s34, 0
      %p66 = por %p64, %p65
      %p67 = scmp.ne.s32.totalorder %s56, %s59
      %p68 = scmp.eq.s32.totalorder %s39, 3
      %p69 = por %p67, %p68
      %p70 = scmp.ne.s32.totalorder %s59, %s60
      %p71 = scmp.eq.s32.totalorder %s39, 0
      %p72 = por %p70, %p71
      %p73 = scmp.ne.s32.totalorder %s59, %s60
      %p74 = scmp.eq.s32.totalorder %s40, 3
      %p75 = por %p73, %p74
      %p77 = scmp.ne.s32.totalorder %s60, %s76
      %p78 = scmp.eq.s32.totalorder %s40, 0
      %p79 = por %p77, %p78
      %s81 = sadd.s32 %s80, 1
      %p84 = scmp.eq.s32.totalorder %s34, 3
      %p85 = scmp.ne.s32.totalorder %s80, %s82
      %p86 = scmp.eq.s32.totalorder %s34, 0
      %p87 = por %p85, %p86
      %p88 = scmp.ne.s32.totalorder %s80, %s82
      %p89 = scmp.eq.s32.totalorder %s39, 3
      %p90 = por %p88, %p89
      %p91 = scmp.ne.s32.totalorder %s82, %s83
      %p92 = scmp.eq.s32.totalorder %s39, 0
      %p93 = por %p91, %p92
      %p94 = scmp.ne.s32.totalorder %s82, %s83
      %p95 = scmp.eq.s32.totalorder %s40, 3
      %p96 = por %p94, %p95
      %p98 = scmp.ne.s32.totalorder %s83, %s97
      %p99 = scmp.eq.s32.totalorder %s40, 0
      %p100 = por %p98, %p99
      %s102 = sadd.s32 %s101, 1
      %p105 = scmp.eq.s32.totalorder %s34, 3
      %p106 = scmp.ne.s32.totalorder %s101, %s103
      %p107 = scmp.eq.s32.totalorder %s34, 0
      %p108 = por %p106, %p107
      %p109 = scmp.ne.s32.totalorder %s101, %s103
      %p110 = scmp.eq.s32.totalorder %s39, 3
      %p111 = por %p109, %p110
      %p112 = scmp.ne.s32.totalorder %s103, %s104
      %p113 = scmp.eq.s32.totalorder %s39, 0
      %p114 = por %p112, %p113
      %p115 = scmp.ne.s32.totalorder %s103, %s104
      %p116 = scmp.eq.s32.totalorder %s40, 3
      %p117 = por %p115, %p116
      %p119 = scmp.ne.s32.totalorder %s104, %s118
      %p120 = scmp.eq.s32.totalorder %s40, 0
      %p121 = por %p119, %p120
      %s123 = sadd.s32 %s122, 1
      %p126 = scmp.eq.s32.totalorder %s34, 3
      %p127 = scmp.ne.s32.totalorder %s122, %s124
      %p128 = scmp.eq.s32.totalorder %s34, 0
      %p129 = por %p127, %p128
      %p130 = scmp.ne.s32.totalorder %s122, %s124
      %p131 = scmp.eq.s32.totalorder %s39, 3
      %p132 = por %p130, %p131
      %p133 = scmp.ne.s32.totalorder %s124, %s125
      %p134 = scmp.eq.s32.totalorder %s39, 0
      %p135 = por %p133, %p134
      %p136 = scmp.ne.s32.totalorder %s124, %s125
      %p137 = scmp.eq.s32.totalorder %s40, 3
      %p138 = por %p136, %p137
      %p140 = scmp.ne.s32.totalorder %s125, %s139
      %p141 = scmp.eq.s32.totalorder %s40, 0
      %p142 = por %p140, %p141
      %s144 = sadd.s32 %s143, 1
      %p147 = scmp.eq.s32.totalorder %s34, 3
      %p148 = scmp.ne.s32.totalorder %s143, %s145
      %p149 = scmp.eq.s32.totalorder %s34, 0
      %p150 = por %p148, %p149
      %p151 = scmp.ne.s32.totalorder %s143, %s145
      %p152 = scmp.eq.s32.totalorder %s39, 3
      %p153 = por %p151, %p152
      %p154 = scmp.ne.s32.totalorder %s145, %s146
      %p155 = scmp.eq.s32.totalorder %s39, 0
      %p156 = por %p154, %p155
      %p157 = scmp.ne.s32.totalorder %s145, %s146
      %p158 = scmp.eq.s32.totalorder %s40, 3
      %p159 = por %p157, %p158
      %p161 = scmp.ne.s32.totalorder %s146, %s160
      %p162 = scmp.eq.s32.totalorder %s40, 0
      %p163 = por %p161, %p162
      %s165 = sadd.s32 %s164, 1
      %p168 = scmp.eq.s32.totalorder %s34, 3
      %p169 = scmp.ne.s32.totalorder %s164, %s166
      %p170 = scmp.eq.s32.totalorder %s34, 0
      %p171 = por %p169, %p170
      %p172 = scmp.ne.s32.totalorder %s164, %s166
      %p173 = scmp.eq.s32.totalorder %s39, 3
      %p174 = por %p172, %p173
      %p175 = scmp.ne.s32.totalorder %s166, %s167
      %p176 = scmp.eq.s32.totalorder %s39, 0
      %p177 = por %p175, %p176
      %p178 = scmp.ne.s32.totalorder %s166, %s167
      %p179 = scmp.eq.s32.totalorder %s40, 3
      %p180 = por %p178, %p179
      %p182 = scmp.ne.s32.totalorder %s167, %s181
      %p183 = scmp.eq.s32.totalorder %s40, 0
      %p184 = por %p182, %p183
      %s185 = ssub.s32 %s42, %s49
      %p186 = scmp.eq.s32.totalorder %s185, 0
      %s188 = sadd.s32 %s187, 1
      %s189 = scalar_select %p186, %s187, %s188
      %p192 = pneg %p186
      %p193 = scmp.eq.s32.totalorder %s34, 3
      %p194 = por %p192, %p193
      %p195 = scmp.ne.s32.totalorder %s187, %s190
      %p196 = scmp.eq.s32.totalorder %s34, 0
      %p197 = por %p195, %p196
      %p198 = scmp.ne.s32.totalorder %s187, %s190
      %p199 = scmp.eq.s32.totalorder %s39, 3
      %p200 = por %p198, %p199
      %p201 = scmp.ne.s32.totalorder %s190, %s191
      %p202 = scmp.eq.s32.totalorder %s39, 0
      %p203 = por %p201, %p202
      %p204 = scmp.ne.s32.totalorder %s190, %s191
      %p205 = scmp.eq.s32.totalorder %s40, 3
      %p206 = por %p204, %p205
      %p208 = scmp.ne.s32.totalorder %s191, %s207
      %p209 = scmp.eq.s32.totalorder %s40, 0
      %p210 = por %p208, %p209
      %s211 = ssub.s32 %s42, %s49
      %p212 = scmp.eq.s32.totalorder %s211, 0
      %s214 = sadd.s32 %s213, 1
      %s215 = scalar_select %p212, %s213, %s214
      %p218 = pneg %p212
      %p219 = scmp.eq.s32.totalorder %s34, 3
      %p220 = por %p218, %p219
      %p221 = scmp.ne.s32.totalorder %s213, %s216
      %p222 = scmp.eq.s32.totalorder %s34, 0
      %p223 = por %p221, %p222
      %p224 = scmp.ne.s32.totalorder %s213, %s216
      %p225 = scmp.eq.s32.totalorder %s39, 3
      %p226 = por %p224, %p225
      %p227 = scmp.ne.s32.totalorder %s216, %s217
      %p228 = scmp.eq.s32.totalorder %s39, 0
      %p229 = por %p227, %p228
      %p230 = scmp.ne.s32.totalorder %s216, %s217
      %p231 = scmp.eq.s32.totalorder %s40, 3
      %p232 = por %p230, %p231
      %p234 = scmp.ne.s32.totalorder %s217, %s233
      %p235 = scmp.eq.s32.totalorder %s40, 0
      %p236 = por %p234, %p235
      %s237 = ssub.s32 %s42, %s49
      %p238 = scmp.eq.s32.totalorder %s237, 0
      %s240 = sadd.s32 %s239, 1
      %s241 = scalar_select %p238, %s239, %s240
      %p244 = pneg %p238
      %p245 = scmp.eq.s32.totalorder %s34, 3
      %p246 = por %p244, %p245
      %p247 = scmp.ne.s32.totalorder %s239, %s242
      %p248 = scmp.eq.s32.totalorder %s34, 0
      %p249 = por %p247, %p248
      %p250 = scmp.ne.s32.totalorder %s239, %s242
      %p251 = scmp.eq.s32.totalorder %s39, 3
      %p252 = por %p250, %p251
      %p253 = scmp.ne.s32.totalorder %s242, %s243
      %p254 = scmp.eq.s32.totalorder %s39, 0
      %p255 = por %p253, %p254
      %p256 = scmp.ne.s32.totalorder %s242, %s243
      %p257 = scmp.eq.s32.totalorder %s40, 3
      %p258 = por %p256, %p257
      %p260 = scmp.ne.s32.totalorder %s243, %s259
      %p261 = scmp.eq.s32.totalorder %s40, 0
      %p262 = por %p260, %p261
      %s263 = ssub.s32 %s42, %s49
      %p264 = scmp.eq.s32.totalorder %s263, 0
      %s266 = sadd.s32 %s265, 1
      %s267 = scalar_select %p264, %s265, %s266
      %p270 = pneg %p264
      %p271 = scmp.eq.s32.totalorder %s34, 3
      %p272 = por %p270, %p271
      %p273 = scmp.ne.s32.totalorder %s265, %s268
      %p274 = scmp.eq.s32.totalorder %s34, 0
      %p275 = por %p273, %p274
      %p276 = scmp.ne.s32.totalorder %s265, %s268
      %p277 = scmp.eq.s32.totalorder %s39, 3
      %p278 = por %p276, %p277
      %p279 = scmp.ne.s32.totalorder %s268, %s269
      %p280 = scmp.eq.s32.totalorder %s39, 0
      %p281 = por %p279, %p280
      %p282 = scmp.ne.s32.totalorder %s268, %s269
      %p283 = scmp.eq.s32.totalorder %s40, 3
      %p284 = por %p282, %p283
      %p286 = scmp.ne.s32.totalorder %s269, %s285
      %p287 = scmp.eq.s32.totalorder %s40, 0
      %p288 = por %p286, %p287
      %s289 = ssub.s32 %s42, %s49
      %p290 = scmp.eq.s32.totalorder %s289, 0
      %s292 = sadd.s32 %s291, 1
      %s293 = scalar_select %p290, %s291, %s292
      %p296 = pneg %p290
      %p297 = scmp.eq.s32.totalorder %s34, 3
      %p298 = por %p296, %p297
      %p299 = scmp.ne.s32.totalorder %s291, %s294
      %p300 = scmp.eq.s32.totalorder %s34, 0
      %p301 = por %p299, %p300
      %p302 = scmp.ne.s32.totalorder %s291, %s294
      %p303 = scmp.eq.s32.totalorder %s39, 3
      %p304 = por %p302, %p303
      %p305 = scmp.ne.s32.totalorder %s294, %s295
      %p306 = scmp.eq.s32.totalorder %s39, 0
      %p307 = por %p305, %p306
      %p308 = scmp.ne.s32.totalorder %s294, %s295
      %p309 = scmp.eq.s32.totalorder %s40, 3
      %p310 = por %p308, %p309
      %p312 = scmp.ne.s32.totalorder %s295, %s311
      %p313 = scmp.eq.s32.totalorder %s40, 0
      %p314 = por %p312, %p313
      %s315 = ssub.s32 %s42, %s49
      %p316 = scmp.eq.s32.totalorder %s315, 0
      %s318 = sadd.s32 %s317, 1
      %s319 = scalar_select %p316, %s317, %s318
      %p322 = pneg %p316
      %p323 = scmp.eq.s32.totalorder %s34, 3
      %p324 = por %p322, %p323
      %p325 = scmp.ne.s32.totalorder %s317, %s320
      %p326 = scmp.eq.s32.totalorder %s34, 0
      %p327 = por %p325, %p326
      %p328 = scmp.ne.s32.totalorder %s317, %s320
      %p329 = scmp.eq.s32.totalorder %s39, 3
      %p330 = por %p328, %p329
      %p331 = scmp.ne.s32.totalorder %s320, %s321
      %p332 = scmp.eq.s32.totalorder %s39, 0
      %p333 = por %p331, %p332
      %p334 = scmp.ne.s32.totalorder %s320, %s321
      %p335 = scmp.eq.s32.totalorder %s40, 3
      %p336 = por %p334, %p335
      %p338 = scmp.ne.s32.totalorder %s321, %s337
      %p339 = scmp.eq.s32.totalorder %s40, 0
      %p340 = por %p338, %p339
      %s341 = ssub.s32 %s42, %s49
      %p342 = scmp.eq.s32.totalorder %s341, 0
      %s344 = sadd.s32 %s343, 1
      %s345 = scalar_select %p342, %s343, %s344
      %p348 = pneg %p342
      %p349 = scmp.eq.s32.totalorder %s34, 3
      %p350 = por %p348, %p349
      %p351 = scmp.ne.s32.totalorder %s343, %s346
      %p352 = scmp.eq.s32.totalorder %s34, 0
      %p353 = por %p351, %p352
      %p354 = scmp.ne.s32.totalorder %s343, %s346
      %p355 = scmp.eq.s32.totalorder %s39, 3
      %p356 = por %p354, %p355
      %p357 = scmp.ne.s32.totalorder %s346, %s347
      %p358 = scmp.eq.s32.totalorder %s39, 0
      %p359 = por %p357, %p358
      %p360 = scmp.ne.s32.totalorder %s346, %s347
      %p361 = scmp.eq.s32.totalorder %s40, 3
      %p362 = por %p360, %p361
      %p364 = scmp.ne.s32.totalorder %s347, %s363
      %p365 = scmp.eq.s32.totalorder %s40, 0
      %p366 = por %p364, %p365
      %s367 = ssub.s32 %s42, %s49
      %p368 = scmp.eq.s32.totalorder %s367, 0
      %s370 = sadd.s32 %s369, 1
      %s371 = scalar_select %p368, %s369, %s370
      %p374 = pneg %p368
      %p375 = scmp.eq.s32.totalorder %s34, 3
      %p376 = por %p374, %p375
      %p377 = scmp.ne.s32.totalorder %s369, %s372
      %p378 = scmp.eq.s32.totalorder %s34, 0
      %p379 = por %p377, %p378
      %p380 = scmp.ne.s32.totalorder %s369, %s372
      %p381 = scmp.eq.s32.totalorder %s39, 3
      %p382 = por %p380, %p381
      %p383 = scmp.ne.s32.totalorder %s372, %s373
      %p384 = scmp.eq.s32.totalorder %s39, 0
      %p385 = por %p383, %p384
      %p386 = scmp.ne.s32.totalorder %s372, %s373
      %p387 = scmp.eq.s32.totalorder %s40, 3
      %p388 = por %p386, %p387
      %p390 = scmp.ne.s32.totalorder %s373, %s389
      %p391 = scmp.eq.s32.totalorder %s40, 0
      %p392 = por %p390, %p391
      %s393 = ssub.s32 %s42, %s49
      %p394 = scmp.eq.s32.totalorder %s393, 0
      %s396 = sadd.s32 %s395, 1
      %s397 = scalar_select %p394, %s395, %s396
      %p400 = pneg %p394
      %p401 = scmp.eq.s32.totalorder %s34, 3
      %p402 = por %p400, %p401
      %p403 = scmp.ne.s32.totalorder %s395, %s398
      %p404 = scmp.eq.s32.totalorder %s34, 0
      %p405 = por %p403, %p404
      %p406 = scmp.ne.s32.totalorder %s395, %s398
      %p407 = scmp.eq.s32.totalorder %s39, 3
      %p408 = por %p406, %p407
      %p409 = scmp.ne.s32.totalorder %s398, %s399
      %p410 = scmp.eq.s32.totalorder %s39, 0
      %p411 = por %p409, %p410
      %p412 = scmp.ne.s32.totalorder %s398, %s399
      %p413 = scmp.eq.s32.totalorder %s40, 3
      %p414 = por %p412, %p413
      %p416 = scmp.ne.s32.totalorder %s399, %s415
      %p417 = scmp.eq.s32.totalorder %s40, 0
      %p418 = por %p416, %p417
      %s419 = ssub.s32 %s42, %s49
      %p420 = scmp.eq.s32.totalorder %s419, 0
      %s422 = sadd.s32 %s421, 1
      %s423 = scalar_select %p420, %s421, %s422
      %p426 = pneg %p420
      %p427 = scmp.eq.s32.totalorder %s34, 3
      %p428 = por %p426, %p427
      %p429 = scmp.ne.s32.totalorder %s421, %s424
      %p430 = scmp.eq.s32.totalorder %s34, 0
      %p431 = por %p429, %p430
      %p432 = scmp.ne.s32.totalorder %s421, %s424
      %p433 = scmp.eq.s32.totalorder %s39, 3
      %p434 = por %p432, %p433
      %p435 = scmp.ne.s32.totalorder %s424, %s425
      %p436 = scmp.eq.s32.totalorder %s39, 0
      %p437 = por %p435, %p436
      %p438 = scmp.ne.s32.totalorder %s424, %s425
      %p439 = scmp.eq.s32.totalorder %s40, 3
      %p440 = por %p438, %p439
      %p442 = scmp.ne.s32.totalorder %s425, %s441
      %p443 = scmp.eq.s32.totalorder %s40, 0
      %p444 = por %p442, %p443
      %s445 = ssub.s32 %s42, %s49
      %p446 = scmp.eq.s32.totalorder %s445, 0
      %s448 = sadd.s32 %s447, 1
      %s449 = scalar_select %p446, %s447, %s448
      %p452 = pneg %p446
      %p453 = scmp.eq.s32.totalorder %s34, 3
      %p454 = por %p452, %p453
      %p455 = scmp.ne.s32.totalorder %s447, %s450
      %p456 = scmp.eq.s32.totalorder %s34, 0
      %p457 = por %p455, %p456
      %p458 = scmp.ne.s32.totalorder %s447, %s450
      %p459 = scmp.eq.s32.totalorder %s39, 3
      %p460 = por %p458, %p459
      %p461 = scmp.ne.s32.totalorder %s450, %s451
      %p462 = scmp.eq.s32.totalorder %s39, 0
      %p463 = por %p461, %p462
      %p464 = scmp.ne.s32.totalorder %s450, %s451
      %p465 = scmp.eq.s32.totalorder %s40, 3
      %p466 = por %p464, %p465
      %p468 = scmp.ne.s32.totalorder %s451, %s467
      %p469 = scmp.eq.s32.totalorder %s40, 0
      %p470 = por %p468, %p469
      %s471 = ssub.s32 %s42, %s49
      %p472 = scmp.eq.s32.totalorder %s471, 0
      %s474 = sadd.s32 %s473, 1
      %s475 = scalar_select %p472, %s473, %s474
      %p478 = pneg %p472
      %p479 = scmp.eq.s32.totalorder %s34, 3
      %p480 = por %p478, %p479
      %p481 = scmp.ne.s32.totalorder %s473, %s476
      %p482 = scmp.eq.s32.totalorder %s34, 0
      %p483 = por %p481, %p482
      %p484 = scmp.ne.s32.totalorder %s473, %s476
      %p485 = scmp.eq.s32.totalorder %s39, 3
      %p486 = por %p484, %p485
      %p487 = scmp.ne.s32.totalorder %s476, %s477
      %p488 = scmp.eq.s32.totalorder %s39, 0
      %p489 = por %p487, %p488
      %p490 = scmp.ne.s32.totalorder %s476, %s477
      %p491 = scmp.eq.s32.totalorder %s40, 3
      %p492 = por %p490, %p491
      %p494 = scmp.ne.s32.totalorder %s477, %s493
      %p495 = scmp.eq.s32.totalorder %s40, 0
      %p496 = por %p494, %p495
      %s498 = sadd.s32 %s497, 1
      %p501 = scmp.eq.s32.totalorder %s34, 3
      %p502 = scmp.ne.s32.totalorder %s497, %s499
      %p503 = scmp.eq.s32.totalorder %s34, 0
      %p504 = por %p502, %p503
      %p505 = scmp.ne.s32.totalorder %s497, %s499
      %p506 = scmp.eq.s32.totalorder %s39, 3
      %p507 = por %p505, %p506
      %p508 = scmp.ne.s32.totalorder %s499, %s500
      %p509 = scmp.eq.s32.totalorder %s39, 0
      %p510 = por %p508, %p509
      %p511 = scmp.ne.s32.totalorder %s499, %s500
      %p512 = scmp.eq.s32.totalorder %s40, 3
      %p513 = por %p511, %p512
      %p515 = scmp.ne.s32.totalorder %s500, %s514
      %p516 = scmp.eq.s32.totalorder %s40, 0
      %p517 = por %p515, %p516
      %s519 = sadd.s32 %s518, 1
      %p522 = scmp.eq.s32.totalorder %s34, 3
      %p523 = scmp.ne.s32.totalorder %s518, %s520
      %p524 = scmp.eq.s32.totalorder %s34, 0
      %p525 = por %p523, %p524
      %p526 = scmp.ne.s32.totalorder %s518, %s520
      %p527 = scmp.eq.s32.totalorder %s39, 3
      %p528 = por %p526, %p527
      %p529 = scmp.ne.s32.totalorder %s520, %s521
      %p530 = scmp.eq.s32.totalorder %s39, 0
      %p531 = por %p529, %p530
      %p532 = scmp.ne.s32.totalorder %s520, %s521
      %p533 = scmp.eq.s32.totalorder %s40, 3
      %p534 = por %p532, %p533
      %p536 = scmp.ne.s32.totalorder %s521, %s535
      %p537 = scmp.eq.s32.totalorder %s40, 0
      %p538 = por %p536, %p537
      %s539 = ssub.s32 %s41, %s53
      %p540 = scmp.eq.s32.totalorder %s539, 0
      %s542 = sadd.s32 %s541, 1
      %s543 = scalar_select %p540, %s541, %s542
      %p546 = pneg %p540
      %p547 = scmp.eq.s32.totalorder %s34, 3
      %p548 = por %p546, %p547
      %p549 = scmp.ne.s32.totalorder %s541, %s544
      %p550 = scmp.eq.s32.totalorder %s34, 0
      %p551 = por %p549, %p550
      %p552 = scmp.ne.s32.totalorder %s541, %s544
      %p553 = scmp.eq.s32.totalorder %s39, 3
      %p554 = por %p552, %p553
      %p555 = scmp.ne.s32.totalorder %s544, %s545
      %p556 = scmp.eq.s32.totalorder %s39, 0
      %p557 = por %p555, %p556
      %p558 = scmp.ne.s32.totalorder %s544, %s545
      %p559 = scmp.eq.s32.totalorder %s40, 3
      %p560 = por %p558, %p559
      %p562 = scmp.ne.s32.totalorder %s545, %s561
      %p563 = scmp.eq.s32.totalorder %s40, 0
      %p564 = por %p562, %p563
      %p565 = scmp.le.s32.totalorder 1, %s34
      %p566 = scmp.lt.s32.totalorder %s34, 5
      %p567 = pnand %p565, %p566
      %p568 = pneg %p567
      // Predicated region
      $region9: #{tpu_custom_call.1} parent=5 // pred_check
        _
      $region10: #{tpu_custom_call.1} parent=5 // pred_check_branch
        %570 = sbr.rel (%p567) target = $region12
      $region11: #{tpu_custom_call.1} parent=5 // pred_region
        %s571 = ssub.s32 %s34, 1
        // Predicated region
        $region13: #{tpu_custom_call.1} parent=11 // pred_check
          %p572 = pneg %p93
        $region14: #{tpu_custom_call.1} parent=11 // pred_check_branch
          %574 = sbr.rel (%p572) target = $region16
        $region15: #{tpu_custom_call.1} parent=11 // pred_region
          _
        $region16: #{tpu_custom_call.1} parent=11 // pred_fallthru
          _
        // Predicated region
        $region17: #{tpu_custom_call.1} parent=11 // pred_check
          %p575 = pneg %p114
        $region18: #{tpu_custom_call.1} parent=11 // pred_check_branch
          %577 = sbr.rel (%p575) target = $region20
        $region19: #{tpu_custom_call.1} parent=11 // pred_region
          %s579 = ssub.s32 16, 16
          %580 = vsyncadd [#allocation3], %s579
          %s582 = sshll.u32 [#allocation2], 4
          %s583 = int_to_ptr.vmem [resolvable:$true] %s582
          %585 = dma.hbm_to_vmem [thread:$0]  %s2, 16, %s583, [#allocation3]
        $region20: #{tpu_custom_call.1} parent=11 // pred_fallthru
          _
        // Predicated region
        $region21: #{tpu_custom_call.1} parent=11 // pred_check
          %p586 = pneg %p135
        $region22: #{tpu_custom_call.1} parent=11 // pred_check_branch
          %588 = sbr.rel (%p586) target = $region24
        $region23: #{tpu_custom_call.1} parent=11 // pred_region
          %s590 = ssub.s32 16, 16
          %591 = vsyncadd [#allocation6], %s590
          %s593 = sshll.u32 [#allocation5], 4
          %s594 = int_to_ptr.vmem [resolvable:$true] %s593
          %596 = dma.hbm_to_vmem [thread:$0]  %s3, 16, %s594, [#allocation6]
        $region24: #{tpu_custom_call.1} parent=11 // pred_fallthru
          _
        // Predicated region
        $region25: #{tpu_custom_call.1} parent=11 // pred_check
          %p597 = pneg %p156
        $region26: #{tpu_custom_call.1} parent=11 // pred_check_branch
          %599 = sbr.rel (%p597) target = $region28
        $region27: #{tpu_custom_call.1} parent=11 // pred_region
          %s601 = ssub.s32 16, 16
          %602 = vsyncadd [#allocation6], %s601
          %s604 = sshll.u32 [#allocation7], 4
          %s605 = int_to_ptr.vmem [resolvable:$true] %s604
          %607 = dma.hbm_to_vmem [thread:$0]  %s4, 16, %s605, [#allocation6]
        $region28: #{tpu_custom_call.1} parent=11 // pred_fallthru
          _
        // Predicated region
        $region29: #{tpu_custom_call.1} parent=11 // pred_check
          %p608 = pneg %p177
        $region30: #{tpu_custom_call.1} parent=11 // pred_check_branch
          %610 = sbr.rel (%p608) target = $region32
        $region31: #{tpu_custom_call.1} parent=11 // pred_region
          _
        $region32: #{tpu_custom_call.1} parent=11 // pred_fallthru
          _
        // Predicated region
        $region33: #{tpu_custom_call.1} parent=11 // pred_check
          %p611 = pneg %p510
        $region34: #{tpu_custom_call.1} parent=11 // pred_check_branch
          %613 = sbr.rel (%p611) target = $region36
        $region35: #{tpu_custom_call.1} parent=11 // pred_region
          _
        $region36: #{tpu_custom_call.1} parent=11 // pred_fallthru
          _
        // Predicated region
        $region37: #{tpu_custom_call.1} parent=11 // pred_check
          %p614 = pneg %p531
        $region38: #{tpu_custom_call.1} parent=11 // pred_check_branch
          %616 = sbr.rel (%p614) target = $region40
        $region39: #{tpu_custom_call.1} parent=11 // pred_region
          _
        $region40: #{tpu_custom_call.1} parent=11 // pred_fallthru
          _
      $region12: #{tpu_custom_call.1} parent=5 // pred_fallthru
        _
      %p617 = scmp.lt.s32.totalorder %s34, 4
      // Predicated region
      $region41: #{tpu_custom_call.1} parent=5 // pred_check
        %p618 = pneg %p617
      $region42: #{tpu_custom_call.1} parent=5 // pred_check_branch
        %620 = sbr.rel (%p618) target = $region44
      $region43: #{tpu_custom_call.1} parent=5 // pred_region
        // Predicated region
        $region45: #{tpu_custom_call.1} parent=43 // pred_check
          %p621 = pneg %p66
        $region46: #{tpu_custom_call.1} parent=43 // pred_check_branch
          %623 = sbr.rel (%p621) target = $region48
        $region47: #{tpu_custom_call.1} parent=43 // pred_region
          %p624 = scmp.lt.s32.totalorder %s41, 1
          %s625 = scalar_select %p624, %s41, 1
          %s626 = smul.addr %s625, 2
          %s627 = smul.addr %s626, 4
          %s628 = scalar_lea.vmem %s0, %s627
        $region48: #{tpu_custom_call.1} parent=43 // pred_fallthru
          _
        // Predicated region
        $region49: #{tpu_custom_call.1} parent=43 // pred_check
          %p629 = pneg %p197
        $region50: #{tpu_custom_call.1} parent=43 // pred_check_branch
          %631 = sbr.rel (%p629) target = $region52
        $region51: #{tpu_custom_call.1} parent=43 // pred_region
          %p632 = scmp.lt.s32.totalorder %s42, 1
          %s633 = scalar_select %p632, %s42, 1
          %s634 = scalar_lea.vmem %s6, %s633
        $region52: #{tpu_custom_call.1} parent=43 // pred_fallthru
          _
        // Predicated region
        $region53: #{tpu_custom_call.1} parent=43 // pred_check
          %p635 = pneg %p223
        $region54: #{tpu_custom_call.1} parent=43 // pred_check_branch
          %637 = sbr.rel (%p635) target = $region56
        $region55: #{tpu_custom_call.1} parent=43 // pred_region
          %s638 = sand.u32 %s34, 1
          %s639 = scalar_lea.sflag [#allocation9], %s638
          %s640 = sand.u32 %s213, 1
          %s641 = scalar_lea.vmem [#allocation8], %s640
          %s643 = ssub.s32 16, 16
          %644 = vsyncadd %s639, %s643
          %s645 = smul.addr %s42, 16
          %s646 = scalar_lea.hbm %s7, %s645
          %s648 = sshll.u32 %s641, 4
          %s649 = int_to_ptr.vmem [resolvable:$true] %s648
          %651 = dma.hbm_to_vmem [thread:$0]  %s646, 16, %s649, %s639
        $region56: #{tpu_custom_call.1} parent=43 // pred_fallthru
          _
        // Predicated region
        $region57: #{tpu_custom_call.1} parent=43 // pred_check
          %p652 = pneg %p249
        $region58: #{tpu_custom_call.1} parent=43 // pred_check_branch
          %654 = sbr.rel (%p652) target = $region60
        $region59: #{tpu_custom_call.1} parent=43 // pred_region
          %p655 = scmp.lt.s32.totalorder %s42, 1
          %s656 = scalar_select %p655, %s42, 1
          %s657 = smul.addr %s656, 4
          %s658 = smul.addr %s657, 4
          %s659 = scalar_lea.vmem %s8, %s658
        $region60: #{tpu_custom_call.1} parent=43 // pred_fallthru
          _
        // Predicated region
        $region61: #{tpu_custom_call.1} parent=43 // pred_check
          %p660 = pneg %p275
        $region62: #{tpu_custom_call.1} parent=43 // pred_check_branch
          %662 = sbr.rel (%p660) target = $region64
        $region63: #{tpu_custom_call.1} parent=43 // pred_region
          %s663 = sand.u32 %s34, 1
          %s664 = scalar_lea.sflag [#allocation9], %s663
          %s665 = sand.u32 %s265, 1
          %s666 = scalar_lea.vmem [#allocation10], %s665
          %s668 = ssub.s32 16, 16
          %669 = vsyncadd %s664, %s668
          %s670 = smul.addr %s42, 16
          %s671 = scalar_lea.hbm %s9, %s670
          %s673 = sshll.u32 %s666, 4
          %s674 = int_to_ptr.vmem [resolvable:$true] %s673
          %676 = dma.hbm_to_vmem [thread:$0]  %s671, 16, %s674, %s664
        $region64: #{tpu_custom_call.1} parent=43 // pred_fallthru
          _
        // Predicated region
        $region65: #{tpu_custom_call.1} parent=43 // pred_check
          %p677 = pneg %p301
        $region66: #{tpu_custom_call.1} parent=43 // pred_check_branch
          %679 = sbr.rel (%p677) target = $region68
        $region67: #{tpu_custom_call.1} parent=43 // pred_region
          %p680 = scmp.lt.s32.totalorder %s42, 1
          %s681 = scalar_select %p680, %s42, 1
          %s682 = smul.addr %s681, 4
          %s683 = smul.addr %s682, 4
          %s684 = scalar_lea.vmem %s10, %s683
        $region68: #{tpu_custom_call.1} parent=43 // pred_fallthru
          _
        // Predicated region
        $region69: #{tpu_custom_call.1} parent=43 // pred_check
          %p685 = pneg %p327
        $region70: #{tpu_custom_call.1} parent=43 // pred_check_branch
          %687 = sbr.rel (%p685) target = $region72
        $region71: #{tpu_custom_call.1} parent=43 // pred_region
          %p688 = scmp.lt.s32.totalorder %s42, 1
          %s689 = scalar_select %p688, %s42, 1
          %s690 = scalar_lea.vmem %s11, %s689
        $region72: #{tpu_custom_call.1} parent=43 // pred_fallthru
          _
        // Predicated region
        $region73: #{tpu_custom_call.1} parent=43 // pred_check
          %p691 = pneg %p353
        $region74: #{tpu_custom_call.1} parent=43 // pred_check_branch
          %693 = sbr.rel (%p691) target = $region76
        $region75: #{tpu_custom_call.1} parent=43 // pred_region
          %p694 = scmp.lt.s32.totalorder %s42, 1
          %s695 = scalar_select %p694, %s42, 1
          %s696 = scalar_lea.vmem %s12, %s695
        $region76: #{tpu_custom_call.1} parent=43 // pred_fallthru
          _
        // Predicated region
        $region77: #{tpu_custom_call.1} parent=43 // pred_check
          %p697 = pneg %p379
        $region78: #{tpu_custom_call.1} parent=43 // pred_check_branch
          %699 = sbr.rel (%p697) target = $region80
        $region79: #{tpu_custom_call.1} parent=43 // pred_region
          %p700 = scmp.lt.s32.totalorder %s42, 1
          %s701 = scalar_select %p700, %s42, 1
          %s702 = scalar_lea.vmem %s13, %s701
        $region80: #{tpu_custom_call.1} parent=43 // pred_fallthru
          _
        // Predicated region
        $region81: #{tpu_custom_call.1} parent=43 // pred_check
          %p703 = pneg %p405
        $region82: #{tpu_custom_call.1} parent=43 // pred_check_branch
          %705 = sbr.rel (%p703) target = $region84
        $region83: #{tpu_custom_call.1} parent=43 // pred_region
          %p706 = scmp.lt.s32.totalorder %s42, 1
          %s707 = scalar_select %p706, %s42, 1
          %s708 = smul.addr %s707, 4
          %s709 = smul.addr %s708, 4
          %s710 = scalar_lea.vmem %s14, %s709
        $region84: #{tpu_custom_call.1} parent=43 // pred_fallthru
          _
        // Predicated region
        $region85: #{tpu_custom_call.1} parent=43 // pred_check
          %p711 = pneg %p431
        $region86: #{tpu_custom_call.1} parent=43 // pred_check_branch
          %713 = sbr.rel (%p711) target = $region88
        $region87: #{tpu_custom_call.1} parent=43 // pred_region
          %p714 = scmp.lt.s32.totalorder %s42, 1
          %s715 = scalar_select %p714, %s42, 1
          %s716 = scalar_lea.vmem %s15, %s715
        $region88: #{tpu_custom_call.1} parent=43 // pred_fallthru
          _
        // Predicated region
        $region89: #{tpu_custom_call.1} parent=43 // pred_check
          %p717 = pneg %p457
        $region90: #{tpu_custom_call.1} parent=43 // pred_check_branch
          %719 = sbr.rel (%p717) target = $region92
        $region91: #{tpu_custom_call.1} parent=43 // pred_region
          %p720 = scmp.lt.s32.totalorder %s42, 1
          %s721 = scalar_select %p720, %s42, 1
          %s722 = smul.addr %s721, 2
          %s723 = smul.addr %s722, 4
          %s724 = scalar_lea.vmem %s16, %s723
        $region92: #{tpu_custom_call.1} parent=43 // pred_fallthru
          _
        // Predicated region
        $region93: #{tpu_custom_call.1} parent=43 // pred_check
          %p725 = pneg %p483
        $region94: #{tpu_custom_call.1} parent=43 // pred_check_branch
          %727 = sbr.rel (%p725) target = $region96
        $region95: #{tpu_custom_call.1} parent=43 // pred_region
          %p728 = scmp.lt.s32.totalorder %s42, 1
          %s729 = scalar_select %p728, %s42, 1
          %s730 = scalar_lea.vmem %s17, %s729
        $region96: #{tpu_custom_call.1} parent=43 // pred_fallthru
          _
      $region44: #{tpu_custom_call.1} parent=5 // pred_fallthru
        _
      %p731 = scmp.le.s32.totalorder 1, %s34
      %p732 = scmp.lt.s32.totalorder %s34, 5
      %p733 = pnand %p731, %p732
      %p734 = pneg %p733
      // Predicated region
      $region97: #{tpu_custom_call.1} parent=5 // pred_check
        _
      $region98: #{tpu_custom_call.1} parent=5 // pred_check_branch
        %736 = sbr.rel (%p733) target = $region100
      $region99: #{tpu_custom_call.1} parent=5 // pred_region
        %s737 = ssub.s32 %s34, 1
        // Predicated region
        $region101: #{tpu_custom_call.1} parent=99 // pred_check
          %p738 = pneg %p114
        $region102: #{tpu_custom_call.1} parent=99 // pred_check_branch
          %740 = sbr.rel (%p738) target = $region104
        $region103: #{tpu_custom_call.1} parent=99 // pred_region
          %741 = dma.done [#allocation3], 16
        $region104: #{tpu_custom_call.1} parent=99 // pred_fallthru
          _
        // Predicated region
        $region105: #{tpu_custom_call.1} parent=99 // pred_check
          %p742 = pneg %p135
        $region106: #{tpu_custom_call.1} parent=99 // pred_check_branch
          %744 = sbr.rel (%p742) target = $region108
        $region107: #{tpu_custom_call.1} parent=99 // pred_region
          %745 = dma.done [#allocation6], 16
        $region108: #{tpu_custom_call.1} parent=99 // pred_fallthru
          _
        // Predicated region
        $region109: #{tpu_custom_call.1} parent=99 // pred_check
          %p746 = pneg %p156
        $region110: #{tpu_custom_call.1} parent=99 // pred_check_branch
          %748 = sbr.rel (%p746) target = $region112
        $region111: #{tpu_custom_call.1} parent=99 // pred_region
          %749 = dma.done [#allocation6], 16
        $region112: #{tpu_custom_call.1} parent=99 // pred_fallthru
          _
        %s750 = sand.u32 %s39, 1
        %s751 = scalar_lea.sflag [#allocation9], %s750
        %s752 = sand.u32 %s216, 1
        %s753 = scalar_lea.vmem [#allocation8], %s752
        // Predicated region
        $region113: #{tpu_custom_call.1} parent=99 // pred_check
          %p754 = pneg %p229
        $region114: #{tpu_custom_call.1} parent=99 // pred_check_branch
          %756 = sbr.rel (%p754) target = $region116
        $region115: #{tpu_custom_call.1} parent=99 // pred_region
          %757 = dma.done %s751, 16
        $region116: #{tpu_custom_call.1} parent=99 // pred_fallthru
          _
        %s758 = sand.u32 %s39, 1
        %s759 = scalar_lea.sflag [#allocation9], %s758
        %s760 = sand.u32 %s268, 1
        %s761 = scalar_lea.vmem [#allocation10], %s760
        // Predicated region
        $region117: #{tpu_custom_call.1} parent=99 // pred_check
          %p762 = pneg %p281
        $region118: #{tpu_custom_call.1} parent=99 // pred_check_branch
          %764 = sbr.rel (%p762) target = $region120
        $region119: #{tpu_custom_call.1} parent=99 // pred_region
          %765 = dma.done %s759, 16
        $region120: #{tpu_custom_call.1} parent=99 // pred_fallthru
          _
        %p766 = scmp.lt.s32.totalorder %s43, 1
        %s767 = scalar_select %p766, %s43, 1
        %s768 = smul.addr %s767, 2
        %s769 = smul.addr %s768, 4
        %s770 = scalar_lea.vmem %s0, %s769
        %p771 = pneg %p72
        %p772 = pneg %p69
        %p773 = pneg %p93
        %p774 = pneg %p90
        %p775 = pneg %p114
        %p776 = pneg %p111
        %p777 = pneg %p135
        %p778 = pneg %p132
        %p779 = pneg %p156
        %p780 = pneg %p153
        %p781 = pneg %p177
        %p782 = pneg %p174
        %p783 = scmp.lt.s32.totalorder %s44, 1
        %s784 = scalar_select %p783, %s44, 1
        %s785 = scalar_lea.vmem %s6, %s784
        %p786 = pneg %p203
        %p787 = pneg %p200
        %s788 = sand.u32 %s39, 1
        %s789 = scalar_lea.sflag [#allocation9], %s788
        %s790 = sand.u32 %s216, 1
        %s791 = scalar_lea.vmem [#allocation8], %s790
        %p792 = pneg %p229
        %p793 = pneg %p226
        %p794 = scmp.lt.s32.totalorder %s44, 1
        %s795 = scalar_select %p794, %s44, 1
        %s796 = smul.addr %s795, 4
        %s797 = smul.addr %s796, 4
        %s798 = scalar_lea.vmem %s8, %s797
        %p799 = pneg %p255
        %p800 = pneg %p252
        %s801 = sand.u32 %s39, 1
        %s802 = scalar_lea.sflag [#allocation9], %s801
        %s803 = sand.u32 %s268, 1
        %s804 = scalar_lea.vmem [#allocation10], %s803
        %p805 = pneg %p281
        %p806 = pneg %p278
        %p807 = scmp.lt.s32.totalorder %s44, 1
        %s808 = scalar_select %p807, %s44, 1
        %s809 = smul.addr %s808, 4
        %s810 = smul.addr %s809, 4
        %s811 = scalar_lea.vmem %s10, %s810
        %p812 = pneg %p307
        %p813 = pneg %p304
        %p814 = scmp.lt.s32.totalorder %s44, 1
        %s815 = scalar_select %p814, %s44, 1
        %s816 = scalar_lea.vmem %s11, %s815
        %p817 = pneg %p333
        %p818 = pneg %p330
        %p819 = scmp.lt.s32.totalorder %s44, 1
        %s820 = scalar_select %p819, %s44, 1
        %s821 = scalar_lea.vmem %s12, %s820
        %p822 = pneg %p359
        %p823 = pneg %p356
        %p824 = scmp.lt.s32.totalorder %s44, 1
        %s825 = scalar_select %p824, %s44, 1
        %s826 = scalar_lea.vmem %s13, %s825
        %p827 = pneg %p385
        %p828 = pneg %p382
        %p829 = scmp.lt.s32.totalorder %s44, 1
        %s830 = scalar_select %p829, %s44, 1
        %s831 = smul.addr %s830, 4
        %s832 = smul.addr %s831, 4
        %s833 = scalar_lea.vmem %s14, %s832
        %p834 = pneg %p411
        %p835 = pneg %p408
        %p836 = scmp.lt.s32.totalorder %s44, 1
        %s837 = scalar_select %p836, %s44, 1
        %s838 = scalar_lea.vmem %s15, %s837
        %p839 = pneg %p437
        %p840 = pneg %p434
        %p841 = scmp.lt.s32.totalorder %s44, 1
        %s842 = scalar_select %p841, %s44, 1
        %s843 = smul.addr %s842, 2
        %s844 = smul.addr %s843, 4
        %s845 = scalar_lea.vmem %s16, %s844
        %p846 = pneg %p463
        %p847 = pneg %p460
        %p848 = scmp.lt.s32.totalorder %s44, 1
        %s849 = scalar_select %p848, %s44, 1
        %s850 = scalar_lea.vmem %s17, %s849
        %p851 = pneg %p489
        %p852 = pneg %p486
        %p853 = pneg %p510
        %p854 = pneg %p507
        %p855 = pneg %p531
        %p856 = pneg %p528
        %p857 = pneg %p557
        %p858 = pneg %p554
        %s859 = sand.u32 %s544, 1
        %s860 = scalar_lea.sflag [#allocation4], %s859
        %s861 = sand.u32 %s544, 1
        %s862 = smul.addr %s861, 16
        %s863 = scalar_lea.vmem [#allocation11], %s862
        %p864 = scmp.lt.s32.totalorder %s43, 1
        %s865 = scalar_select %p864, %s43, 1
        %s866 = smul.addr %s865, 2
        %s867 = smul.addr %s866, 4
        %s868 = scalar_lea.vmem %s0, %s867
        %p869 = scmp.lt.s32.totalorder %s44, 1
        %s870 = scalar_select %p869, %s44, 1
        %s871 = scalar_lea.vmem %s6, %s870
        %p872 = scmp.lt.s32.totalorder %s44, 1
        %s873 = scalar_select %p872, %s44, 1
        %s874 = smul.addr %s873, 4
        %s875 = smul.addr %s874, 4
        %s876 = scalar_lea.vmem %s8, %s875
        %p877 = scmp.lt.s32.totalorder %s44, 1
        %s878 = scalar_select %p877, %s44, 1
        %s879 = smul.addr %s878, 4
        %s880 = smul.addr %s879, 4
        %s881 = scalar_lea.vmem %s10, %s880
        %p882 = scmp.lt.s32.totalorder %s44, 1
        %s883 = scalar_select %p882, %s44, 1
        %s884 = scalar_lea.vmem %s11, %s883
        %p885 = scmp.lt.s32.totalorder %s44, 1
        %s886 = scalar_select %p885, %s44, 1
        %s887 = scalar_lea.vmem %s12, %s886
        %p888 = scmp.lt.s32.totalorder %s44, 1
        %s889 = scalar_select %p888, %s44, 1
        %s890 = scalar_lea.vmem %s13, %s889
        %p891 = scmp.lt.s32.totalorder %s44, 1
        %s892 = scalar_select %p891, %s44, 1
        %s893 = smul.addr %s892, 4
        %s894 = smul.addr %s893, 4
        %s895 = scalar_lea.vmem %s14, %s894
        %p896 = scmp.lt.s32.totalorder %s44, 1
        %s897 = scalar_select %p896, %s44, 1
        %s898 = scalar_lea.vmem %s15, %s897
        %p899 = scmp.lt.s32.totalorder %s44, 1
        %s900 = scalar_select %p899, %s44, 1
        %s901 = smul.addr %s900, 2
        %s902 = smul.addr %s901, 4
        %s903 = scalar_lea.vmem %s16, %s902
        %p904 = scmp.lt.s32.totalorder %s44, 1
        %s905 = scalar_select %p904, %s44, 1
        %s906 = scalar_lea.vmem %s17, %s905
        %p908 = scmp.eq.s32.totalorder %s44, 0
        // Predicated region
        $region121: #{tpu_custom_call.1} parent=99 // pred_check
          %p909 = pneg %p908
        $region122: #{tpu_custom_call.1} parent=99 // pred_check_branch
          %911 = sbr.rel (%p909) target = $region124
        $region123: #{tpu_custom_call.1} parent=99 // pred_region
          %v912 = vld [vmem:[%s868] sm:$0xf]
          %v913 = vld [vmem:[%s868 + $0x4] sm:$0xf]
          %v914 = vld [vmem:[%s1] sm:$0xf]
          %v915 = vld [vmem:[%s1 + $0x4] sm:$0xf]
          %v916 = vld [vmem:[%s1 + $0x8] sm:$0xf]
          %v917 = vld [vmem:[%s1 + $0xc] sm:$0xf]
          %v918 = vld [vmem:[%s1 + $0x10] sm:$0xf]
          %v919 = vld [vmem:[%s1 + $0x14] sm:$0xf]
          %v920 = vld [vmem:[%s1 + $0x18] sm:$0xf]
          %v921 = vld [vmem:[%s1 + $0x1c] sm:$0xf]
          %v922 = vld [vmem:[#allocation2] sm:$0x1]
          %v924 = vlaneseq
          %v925 = vshrl.u32 %v924, 7
          %v926 = vsub.s32 0, %v925
          %v927 = vrot.slane %v922, %v926
          %v931 = vunpack.c.l.b16 %v912
          %v932 = vunpack.c.l.b16 %v913
          %v933 = vpack.c.b16 %v932, %v931
          %v942 = vunpack.c.l.b16 %v914
          %v943 = vunpack.c.l.b16 %v915
          %v944 = vunpack.c.l.b16 %v916
          %v945 = vunpack.c.l.b16 %v917
          %v946 = vunpack.c.l.b16 %v918
          %v947 = vunpack.c.l.b16 %v919
          %v948 = vunpack.c.l.b16 %v920
          %v949 = vunpack.c.l.b16 %v921
          %v950 = vpack.c.b16 %v943, %v942
          %v951 = vpack.c.b16 %v945, %v944
          %v952 = vpack.c.b16 %v947, %v946
          %v953 = vpack.c.b16 %v949, %v948
          %vm958 = vcmask 523264
          %v960 = vsel %vm958, %v933, 0
          %962 = vmatprep.subr.bf16.mxu0 0
          %963 = vmatpush1.bf16.msra.mxu0 %v950
          %964 = vmatprep.subr.bf16.mxu0 0
          %965 = vmatpush1.bf16.msra.mxu0 %v951
          %966 = vmatprep.subr.bf16.mxu0 0
          %967 = vmatpush1.bf16.msra.mxu0 %v952
          %968 = vmatprep.subr.bf16.mxu0 0
          %969 = vmatpush1.bf16.msra.mxu0 %v953
          %970 = vmatprep.subr.bf16.mxu0 0
          %971 = vmatpush1.bf16.msra.mxu0 0
          %972 = vmatprep.subr.bf16.mxu0 0
          %973 = vmatpush1.bf16.msra.mxu0 0
          %974 = vmatprep.subr.bf16.mxu0 0
          %975 = vmatpush1.bf16.msra.mxu0 0
          %976 = vmatprep.subr.bf16.mxu0 0
          %977 = vmatpush1.bf16.msra.mxu0 0
          %978 = vmatprep.subr.bf16.mxu0 0
          %979 = vmatpush1.bf16.msra.mxu0 0
          %980 = vmatprep.subr.bf16.mxu0 0
          %981 = vmatpush1.bf16.msra.mxu0 0
          %982 = vmatprep.subr.bf16.mxu0 0
          %983 = vmatpush1.bf16.msra.mxu0 0
          %984 = vmatprep.subr.bf16.mxu0 0
          %985 = vmatpush1.bf16.msra.mxu0 0
          %986 = vmatprep.subr.bf16.mxu0 0
          %987 = vmatpush1.bf16.msra.mxu0 0
          %988 = vmatprep.subr.bf16.mxu0 0
          %989 = vmatpush1.bf16.msra.mxu0 0
          %990 = vmatprep.subr.bf16.mxu0 0
          %991 = vmatpush1.bf16.msra.mxu0 0
          %992 = vmatprep.subr.bf16.mxu0 0
          %993 = vmatpush1.bf16.msra.mxu0 0
          %994 = vmatprep.mubr.bf16.mxu0 0
          %995 = vmatmul.mubr.bf16.gmra.mrb[0].mxu0 %v960
          %v996 = vpop.f32.mrb[0].mxu0
          %v997 = vadd.f32 %v927, %v996
          %v998 = vpop.f32.mrb[0].mxu0
          %v999 = vpop.f32.mrb[0].mxu0
          %v1000 = vadd.f32 %v927, %v999
          %v1001 = vpop.f32.mrb[0].mxu0
          %1002 = vdwg.mxu0
          %v1003 = vld [vmem:[#allocation5] sm:$0x1]
          %v1004 = vld [vmem:[#allocation7] sm:$0x1]
          %vm1005 = vcmask 261120
          %v1006 = vsel %vm1005, %v997, 0.0
          %1007 = vadd.xlane.f32.xlu0 %v1006
          %v1008 = vpop.xlane.xlu0 %1007
          %v1009 = vsel %vm1005, %v1000, 0.0
          %1010 = vadd.xlane.f32.xlu0 %v1009
          %v1011 = vpop.xlane.xlu0 %1010
          %v1012 = vrcp.pop 32.0
          %v1013 = vmul.f32 %v1008, %v1012
          %v1014 = vmul.f32 %v1011, %v1012
          %v1015 = vsub.f32 %v997, %v1013
          %v1016 = vsub.f32 %v1000, %v1014
          %v1017 = vmul.f32 %v1015, %v1015
          %v1018 = vmul.f32 %v1016, %v1016
          %v1019 = vsel %vm1005, %v1017, 0.0
          %1020 = vadd.xlane.f32.xlu0 %v1019
          %v1021 = vpop.xlane.xlu0 %1020
          %v1022 = vsel %vm1005, %v1018, 0.0
          %1023 = vadd.xlane.f32.xlu0 %v1022
          %v1024 = vpop.xlane.xlu0 %1023
          %v1025 = vmul.f32 %v1021, %v1012
          %v1026 = vmul.f32 %v1024, %v1012
          %v1027 = vadd.f32 %v1025, 1e-06
          %v1028 = vadd.f32 %v1026, 1e-06
          %v1029 = vrsqrt.pop %v1027
          %v1030 = vrsqrt.pop %v1028
          %v1031 = vmul.f32 %v1015, %v1029
          %v1032 = vmul.f32 %v1016, %v1030
          %v1034 = vlaneseq
          %v1035 = vshrl.u32 %v1034, 7
          %v1036 = vsub.s32 0, %v1035
          %v1037 = vrot.slane %v1003, %v1036
          %v1039 = vmul.f32 %v1031, %v1037
          %v1040 = vmul.f32 %v1032, %v1037
          %v1042 = vlaneseq
          %v1043 = vshrl.u32 %v1042, 7
          %v1044 = vsub.s32 0, %v1043
          %v1045 = vrot.slane %v1004, %v1044
          %v1047 = vadd.f32 %v1039, %v1045
          %v1048 = vadd.f32 %v1040, %v1045
          %v1049 = vld [vmem:[%s5] sm:$0xff]
          %v1050 = vld [vmem:[%s5 + $0x8] sm:$0xff]
          %v1051 = vadd.f32 %v1047, %v1049
          %v1052 = vadd.f32 %v1048, %v1050
          %1053 = vst.msk [vmem:[%s863] sm:$0xff] %vm1005, %v1051
          %1054 = vst.msk [vmem:[%s863 + $0x8] sm:$0xff] %vm1005, %v1052
        $region124: #{tpu_custom_call.1} parent=99 // pred_fallthru
          _
        %v1055 = vld [vmem:[%s863] sm:$0xff]
        %v1056 = vld [vmem:[%s863 + $0x8] sm:$0xff]
        %v1057 = vld [vmem:[%s871] sm:$0x1]
        %v1058 = vld [vmem:[%s753] sm:$0x1]
        %vm1059 = vcmask 261120
        %v1060 = vsel %vm1059, %v1055, 0.0
        %1061 = vadd.xlane.f32.xlu0 %v1060
        %v1062 = vpop.xlane.xlu0 %1061
        %v1063 = vsel %vm1059, %v1056, 0.0
        %1064 = vadd.xlane.f32.xlu0 %v1063
        %v1065 = vpop.xlane.xlu0 %1064
        %v1066 = vrcp.pop 32.0
        %v1067 = vmul.f32 %v1062, %v1066
        %v1068 = vmul.f32 %v1065, %v1066
        %v1069 = vsub.f32 %v1055, %v1067
        %v1070 = vsub.f32 %v1056, %v1068
        %v1071 = vmul.f32 %v1069, %v1069
        %v1072 = vmul.f32 %v1070, %v1070
        %v1073 = vsel %vm1059, %v1071, 0.0
        %1074 = vadd.xlane.f32.xlu0 %v1073
        %v1075 = vpop.xlane.xlu0 %1074
        %v1076 = vsel %vm1059, %v1072, 0.0
        %1077 = vadd.xlane.f32.xlu0 %v1076
        %v1078 = vpop.xlane.xlu0 %1077
        %v1079 = vmul.f32 %v1075, %v1066
        %v1080 = vmul.f32 %v1078, %v1066
        %v1081 = vadd.f32 %v1079, 1e-06
        %v1082 = vadd.f32 %v1080, 1e-06
        %v1083 = vrsqrt.pop %v1081
        %v1084 = vrsqrt.pop %v1082
        %v1085 = vmul.f32 %v1069, %v1083
        %v1086 = vmul.f32 %v1070, %v1084
        %v1088 = vlaneseq
        %v1089 = vshrl.u32 %v1088, 7
        %v1090 = vsub.s32 0, %v1089
        %v1091 = vrot.slane %v1057, %v1090
        %v1093 = vmul.f32 %v1085, %v1091
        %v1094 = vmul.f32 %v1086, %v1091
        %v1096 = vlaneseq
        %v1097 = vshrl.u32 %v1096, 7
        %v1098 = vsub.s32 0, %v1097
        %v1099 = vrot.slane %v1058, %v1098
        %v1101 = vadd.f32 %v1093, %v1099
        %v1102 = vadd.f32 %v1094, %v1099
        %v1103 = vpack.c.bf16 %v1102, %v1101
        %v1104 = vld [vmem:[%s876] sm:$0xf]
        %v1105 = vld [vmem:[%s876 + $0x4] sm:$0xf]
        %v1106 = vld [vmem:[%s876 + $0x8] sm:$0xf]
        %v1107 = vld [vmem:[%s876 + $0xc] sm:$0xf]
        %v1108 = vld [vmem:[%s761] sm:$0x1]
        %v1110 = vlaneseq
        %v1111 = vshrl.u32 %v1110, 7
        %v1112 = vsub.s32 0, %v1111
        %v1113 = vrot.slane %v1108, %v1112
        %v1119 = vunpack.c.l.b16 %v1104
        %v1120 = vunpack.c.l.b16 %v1105
        %v1121 = vunpack.c.l.b16 %v1106
        %v1122 = vunpack.c.l.b16 %v1107
        %v1123 = vpack.c.b16 %v1120, %v1119
        %v1124 = vpack.c.b16 %v1122, %v1121
        %v1128 = vsel %vm1059, %v1103, 0
        %1130 = vmatprep.subr.bf16.mxu0 0
        %1131 = vmatpush1.bf16.msra.mxu0 %v1123
        %1132 = vmatprep.subr.bf16.mxu0 0
        %1133 = vmatpush1.bf16.msra.mxu0 %v1124
        %1134 = vmatprep.subr.bf16.mxu0 0
        %1135 = vmatpush1.bf16.msra.mxu0 0
        %1136 = vmatprep.subr.bf16.mxu0 0
        %1137 = vmatpush1.bf16.msra.mxu0 0
        %1138 = vmatprep.subr.bf16.mxu0 0
        %1139 = vmatpush1.bf16.msra.mxu0 0
        %1140 = vmatprep.subr.bf16.mxu0 0
        %1141 = vmatpush1.bf16.msra.mxu0 0
        %1142 = vmatprep.subr.bf16.mxu0 0
        %1143 = vmatpush1.bf16.msra.mxu0 0
        %1144 = vmatprep.subr.bf16.mxu0 0
        %1145 = vmatpush1.bf16.msra.mxu0 0
        %1146 = vmatprep.subr.bf16.mxu0 0
        %1147 = vmatpush1.bf16.msra.mxu0 0
        %1148 = vmatprep.subr.bf16.mxu0 0
        %1149 = vmatpush1.bf16.msra.mxu0 0
        %1150 = vmatprep.subr.bf16.mxu0 0
        %1151 = vmatpush1.bf16.msra.mxu0 0
        %1152 = vmatprep.subr.bf16.mxu0 0
        %1153 = vmatpush1.bf16.msra.mxu0 0
        %1154 = vmatprep.subr.bf16.mxu0 0
        %1155 = vmatpush1.bf16.msra.mxu0 0
        %1156 = vmatprep.subr.bf16.mxu0 0
        %1157 = vmatpush1.bf16.msra.mxu0 0
        %1158 = vmatprep.subr.bf16.mxu0 0
        %1159 = vmatpush1.bf16.msra.mxu0 0
        %1160 = vmatprep.subr.bf16.mxu0 0
        %1161 = vmatpush1.bf16.msra.mxu0 0
        %1162 = vmatprep.mubr.bf16.mxu0 0
        %1163 = vmatmul.mubr.bf16.gmra.mrb[0].mxu0 %v1128
        %v1164 = vpop.f32.mrb[0].mxu0
        %v1165 = vadd.f32 %v1113, %v1164
        %v1166 = vpop.f32.mrb[0].mxu0
        %v1167 = vpop.f32.mrb[0].mxu0
        %v1168 = vadd.f32 %v1113, %v1167
        %v1169 = vpop.f32.mrb[0].mxu0
        %1170 = vdwg.mxu0
        %1173 = vrot.lane.b32.xlu0 %v1165, 120
        %v1174 = vpop.permute.xlu0 %1173
        %1175 = vrot.lane.b32.xlu0 %v1168, 120
        %v1176 = vpop.permute.xlu0 %1175
        %1179 = vrot.lane.b32.xlu0 %v1165, 112
        %v1180 = vpop.permute.xlu0 %1179
        %1181 = vrot.lane.b32.xlu0 %v1168, 112
        %v1182 = vpop.permute.xlu0 %1181
        %1185 = vrot.lane.b32.xlu0 %v1165, 104
        %v1186 = vpop.permute.xlu0 %1185
        %1187 = vrot.lane.b32.xlu0 %v1168, 104
        %v1188 = vpop.permute.xlu0 %1187
        %v1191 = vpack.c.bf16 %v1168, %v1165
        %v1192 = vpack.c.bf16 %v1176, %v1174
        %v1193 = vpack.c.bf16 %v1182, %v1180
        %v1194 = vpack.c.bf16 %v1188, %v1186
        %1196 = vrot.lane.b32.xlu0 %v1191, 96
        %v1197 = vpop.permute.xlu0 %1196
        %vm1198 = vcmask 64512
        %v1200 = vsel %vm1198, %v1191, 0
        %v1203 = vsel %vm1198, %v1197, 0
        %1205 = vmatprep.subr.bf16.mxu0 0
        %1206 = vmatpush1.bf16.xpose.msra.mxu0 %v1203
        %1207 = vmatprep.subr.bf16.mxu0 0
        %1208 = vmatpush1.bf16.xpose.msra.mxu0 0
        %1209 = vmatprep.subr.bf16.mxu0 0
        %1210 = vmatpush1.bf16.xpose.msra.mxu0 0
        %1211 = vmatprep.subr.bf16.mxu0 0
        %1212 = vmatpush1.bf16.xpose.msra.mxu0 0
        %1213 = vmatprep.subr.bf16.mxu0 0
        %1214 = vmatpush1.bf16.xpose.msra.mxu0 0
        %1215 = vmatprep.subr.bf16.mxu0 0
        %1216 = vmatpush1.bf16.xpose.msra.mxu0 0
        %1217 = vmatprep.subr.bf16.mxu0 0
        %1218 = vmatpush1.bf16.xpose.msra.mxu0 0
        %1219 = vmatprep.subr.bf16.mxu0 0
        %1220 = vmatpush1.bf16.xpose.msra.mxu0 0
        %1221 = vmatprep.subr.bf16.mxu0 0
        %1222 = vmatpush1.bf16.xpose.msra.mxu0 0
        %1223 = vmatprep.subr.bf16.mxu0 0
        %1224 = vmatpush1.bf16.xpose.msra.mxu0 0
        %1225 = vmatprep.subr.bf16.mxu0 0
        %1226 = vmatpush1.bf16.xpose.msra.mxu0 0
        %1227 = vmatprep.subr.bf16.mxu0 0
        %1228 = vmatpush1.bf16.xpose.msra.mxu0 0
        %1229 = vmatprep.subr.bf16.mxu0 0
        %1230 = vmatpush1.bf16.xpose.msra.mxu0 0
        %1231 = vmatprep.subr.bf16.mxu0 0
        %1232 = vmatpush1.bf16.xpose.msra.mxu0 0
        %1233 = vmatprep.subr.bf16.mxu0 0
        %1234 = vmatpush1.bf16.xpose.msra.mxu0 0
        %1235 = vmatprep.subr.bf16.mxu0 0
        %1236 = vmatpush1.bf16.xpose.msra.mxu0 0
        %1237 = vmatprep.mubr.bf16.mxu0 0
        %1238 = vmatmul.mubr.bf16.gmra.mrb[0].mxu0 %v1200
        %v1239 = vpop.f32.mrb[0].mxu0
        %v1240 = vadd.f32 0.0, %v1239
        %v1241 = vpop.f32.mrb[0].mxu0
        %v1242 = vpop.f32.mrb[0].mxu0
        %v1243 = vadd.f32 0.0, %v1242
        %v1244 = vpop.f32.mrb[0].mxu0
        %1245 = vdwg.mxu0
        %1247 = vrot.lane.b32.xlu0 %v1192, 96
        %v1248 = vpop.permute.xlu0 %1247
        %v1250 = vsel %vm1198, %v1192, 0
        %v1253 = vsel %vm1198, %v1248, 0
        %1255 = vmatprep.subr.bf16.mxu0 0
        %1256 = vmatpush1.bf16.xpose.msra.mxu0 %v1253
        %1257 = vmatprep.subr.bf16.mxu0 0
        %1258 = vmatpush1.bf16.xpose.msra.mxu0 0
        %1259 = vmatprep.subr.bf16.mxu0 0
        %1260 = vmatpush1.bf16.xpose.msra.mxu0 0
        %1261 = vmatprep.subr.bf16.mxu0 0
        %1262 = vmatpush1.bf16.xpose.msra.mxu0 0
        %1263 = vmatprep.subr.bf16.mxu0 0
        %1264 = vmatpush1.bf16.xpose.msra.mxu0 0
        %1265 = vmatprep.subr.bf16.mxu0 0
        %1266 = vmatpush1.bf16.xpose.msra.mxu0 0
        %1267 = vmatprep.subr.bf16.mxu0 0
        %1268 = vmatpush1.bf16.xpose.msra.mxu0 0
        %1269 = vmatprep.subr.bf16.mxu0 0
        %1270 = vmatpush1.bf16.xpose.msra.mxu0 0
        %1271 = vmatprep.subr.bf16.mxu0 0
        %1272 = vmatpush1.bf16.xpose.msra.mxu0 0
        %1273 = vmatprep.subr.bf16.mxu0 0
        %1274 = vmatpush1.bf16.xpose.msra.mxu0 0
        %1275 = vmatprep.subr.bf16.mxu0 0
        %1276 = vmatpush1.bf16.xpose.msra.mxu0 0
        %1277 = vmatprep.subr.bf16.mxu0 0
        %1278 = vmatpush1.bf16.xpose.msra.mxu0 0
        %1279 = vmatprep.subr.bf16.mxu0 0
        %1280 = vmatpush1.bf16.xpose.msra.mxu0 0
        %1281 = vmatprep.subr.bf16.mxu0 0
        %1282 = vmatpush1.bf16.xpose.msra.mxu0 0
        %1283 = vmatprep.subr.bf16.mxu0 0
        %1284 = vmatpush1.bf16.xpose.msra.mxu0 0
        %1285 = vmatprep.subr.bf16.mxu0 0
        %1286 = vmatpush1.bf16.xpose.msra.mxu0 0
        %1287 = vmatprep.mubr.bf16.mxu0 0
        %1288 = vmatmul.mubr.bf16.gmra.mrb[0].mxu0 %v1250
        %v1289 = vpop.f32.mrb[0].mxu0
        %v1290 = vadd.f32 0.0, %v1289
        %v1291 = vpop.f32.mrb[0].mxu0
        %v1292 = vpop.f32.mrb[0].mxu0
        %v1293 = vadd.f32 0.0, %v1292
        %v1294 = vpop.f32.mrb[0].mxu0
        %1295 = vdwg.mxu0
        %1297 = vrot.lane.b32.xlu0 %v1193, 96
        %v1298 = vpop.permute.xlu0 %1297
        %v1300 = vsel %vm1198, %v1193, 0
        %v1303 = vsel %vm1198, %v1298, 0
        %1305 = vmatprep.subr.bf16.mxu0 0
        %1306 = vmatpush1.bf16.xpose.msra.mxu0 %v1303
        %1307 = vmatprep.subr.bf16.mxu0 0
        %1308 = vmatpush1.bf16.xpose.msra.mxu0 0
        %1309 = vmatprep.subr.bf16.mxu0 0
        %1310 = vmatpush1.bf16.xpose.msra.mxu0 0
        %1311 = vmatprep.subr.bf16.mxu0 0
        %1312 = vmatpush1.bf16.xpose.msra.mxu0 0
        %1313 = vmatprep.subr.bf16.mxu0 0
        %1314 = vmatpush1.bf16.xpose.msra.mxu0 0
        %1315 = vmatprep.subr.bf16.mxu0 0
        %1316 = vmatpush1.bf16.xpose.msra.mxu0 0
        %1317 = vmatprep.subr.bf16.mxu0 0
        %1318 = vmatpush1.bf16.xpose.msra.mxu0 0
        %1319 = vmatprep.subr.bf16.mxu0 0
        %1320 = vmatpush1.bf16.xpose.msra.mxu0 0
        %1321 = vmatprep.subr.bf16.mxu0 0
        %1322 = vmatpush1.bf16.xpose.msra.mxu0 0
        %1323 = vmatprep.subr.bf16.mxu0 0
        %1324 = vmatpush1.bf16.xpose.msra.mxu0 0
        %1325 = vmatprep.subr.bf16.mxu0 0
        %1326 = vmatpush1.bf16.xpose.msra.mxu0 0
        %1327 = vmatprep.subr.bf16.mxu0 0
        %1328 = vmatpush1.bf16.xpose.msra.mxu0 0
        %1329 = vmatprep.subr.bf16.mxu0 0
        %1330 = vmatpush1.bf16.xpose.msra.mxu0 0
        %1331 = vmatprep.subr.bf16.mxu0 0
        %1332 = vmatpush1.bf16.xpose.msra.mxu0 0
        %1333 = vmatprep.subr.bf16.mxu0 0
        %1334 = vmatpush1.bf16.xpose.msra.mxu0 0
        %1335 = vmatprep.subr.bf16.mxu0 0
        %1336 = vmatpush1.bf16.xpose.msra.mxu0 0
        %1337 = vmatprep.mubr.bf16.mxu0 0
        %1338 = vmatmul.mubr.bf16.gmra.mrb[0].mxu0 %v1300
        %v1339 = vpop.f32.mrb[0].mxu0
        %v1340 = vadd.f32 0.0, %v1339
        %v1341 = vpop.f32.mrb[0].mxu0
        %v1342 = vpop.f32.mrb[0].mxu0
        %v1343 = vadd.f32 0.0, %v1342
        %v1344 = vpop.f32.mrb[0].mxu0
        %1345 = vdwg.mxu0
        %1347 = vrot.lane.b32.xlu0 %v1194, 96
        %v1348 = vpop.permute.xlu0 %1347
        %v1350 = vsel %vm1198, %v1194, 0
        %v1353 = vsel %vm1198, %v1348, 0
        %1355 = vmatprep.subr.bf16.mxu0 0
        %1356 = vmatpush1.bf16.xpose.msra.mxu0 %v1353
        %1357 = vmatprep.subr.bf16.mxu0 0
        %1358 = vmatpush1.bf16.xpose.msra.mxu0 0
        %1359 = vmatprep.subr.bf16.mxu0 0
        %1360 = vmatpush1.bf16.xpose.msra.mxu0 0
        %1361 = vmatprep.subr.bf16.mxu0 0
        %1362 = vmatpush1.bf16.xpose.msra.mxu0 0
        %1363 = vmatprep.subr.bf16.mxu0 0
        %1364 = vmatpush1.bf16.xpose.msra.mxu0 0
        %1365 = vmatprep.subr.bf16.mxu0 0
        %1366 = vmatpush1.bf16.xpose.msra.mxu0 0
        %1367 = vmatprep.subr.bf16.mxu0 0
        %1368 = vmatpush1.bf16.xpose.msra.mxu0 0
        %1369 = vmatprep.subr.bf16.mxu0 0
        %1370 = vmatpush1.bf16.xpose.msra.mxu0 0
        %1371 = vmatprep.subr.bf16.mxu0 0
        %1372 = vmatpush1.bf16.xpose.msra.mxu0 0
        %1373 = vmatprep.subr.bf16.mxu0 0
        %1374 = vmatpush1.bf16.xpose.msra.mxu0 0
        %1375 = vmatprep.subr.bf16.mxu0 0
        %1376 = vmatpush1.bf16.xpose.msra.mxu0 0
        %1377 = vmatprep.subr.bf16.mxu0 0
        %1378 = vmatpush1.bf16.xpose.msra.mxu0 0
        %1379 = vmatprep.subr.bf16.mxu0 0
        %1380 = vmatpush1.bf16.xpose.msra.mxu0 0
        %1381 = vmatprep.subr.bf16.mxu0 0
        %1382 = vmatpush1.bf16.xpose.msra.mxu0 0
        %1383 = vmatprep.subr.bf16.mxu0 0
        %1384 = vmatpush1.bf16.xpose.msra.mxu0 0
        %1385 = vmatprep.subr.bf16.mxu0 0
        %1386 = vmatpush1.bf16.xpose.msra.mxu0 0
        %1387 = vmatprep.mubr.bf16.mxu0 0
        %1388 = vmatmul.mubr.bf16.gmra.mrb[0].mxu0 %v1350
        %v1389 = vpop.f32.mrb[0].mxu0
        %v1390 = vadd.f32 0.0, %v1389
        %v1391 = vpop.f32.mrb[0].mxu0
        %v1392 = vpop.f32.mrb[0].mxu0
        %v1393 = vadd.f32 0.0, %v1392
        %v1394 = vpop.f32.mrb[0].mxu0
        %1395 = vdwg.mxu0
        %v1396 = vmul.f32 %v1240, 2.828427
        %v1397 = vmul.f32 %v1243, 2.828427
        %v1398 = vmul.f32 %v1290, 2.828427
        %v1399 = vmul.f32 %v1293, 2.828427
        %v1400 = vmul.f32 %v1340, 2.828427
        %v1401 = vmul.f32 %v1343, 2.828427
        %v1402 = vmul.f32 %v1390, 2.828427
        %v1403 = vmul.f32 %v1393, 2.828427
        %vm1404 = vcmask 130048
        %v1405 = vsel %vm1404, %v1396, -inf
        %1406 = vmax.xlane.f32.xlu0 %v1405
        %v1407 = vpop.xlane.xlu0 %1406
        %v1408 = vsel %vm1404, %v1397, -inf
        %1409 = vmax.xlane.f32.xlu0 %v1408
        %v1410 = vpop.xlane.xlu0 %1409
        %v1411 = vsel %vm1404, %v1398, -inf
        %1412 = vmax.xlane.f32.xlu0 %v1411
        %v1413 = vpop.xlane.xlu0 %1412
        %v1414 = vsel %vm1404, %v1399, -inf
        %1415 = vmax.xlane.f32.xlu0 %v1414
        %v1416 = vpop.xlane.xlu0 %1415
        %v1417 = vsel %vm1404, %v1400, -inf
        %1418 = vmax.xlane.f32.xlu0 %v1417
        %v1419 = vpop.xlane.xlu0 %1418
        %v1420 = vsel %vm1404, %v1401, -inf
        %1421 = vmax.xlane.f32.xlu0 %v1420
        %v1422 = vpop.xlane.xlu0 %1421
        %v1423 = vsel %vm1404, %v1402, -inf
        %1424 = vmax.xlane.f32.xlu0 %v1423
        %v1425 = vpop.xlane.xlu0 %1424
        %v1426 = vsel %vm1404, %v1403, -inf
        %1427 = vmax.xlane.f32.xlu0 %v1426
        %v1428 = vpop.xlane.xlu0 %1427
        %v1429 = vsub.f32 %v1396, %v1407
        %v1430 = vsub.f32 %v1397, %v1410
        %v1431 = vsub.f32 %v1398, %v1413
        %v1432 = vsub.f32 %v1399, %v1416
        %v1433 = vsub.f32 %v1400, %v1419
        %v1434 = vsub.f32 %v1401, %v1422
        %v1435 = vsub.f32 %v1402, %v1425
        %v1436 = vsub.f32 %v1403, %v1428
        %v1437 = vmul.f32 %v1429, 1.442695
        %v1438 = vpow.pop %v1437
        %v1439 = vmul.f32 %v1430, 1.442695
        %v1440 = vpow.pop %v1439
        %v1441 = vmul.f32 %v1431, 1.442695
        %v1442 = vpow.pop %v1441
        %v1443 = vmul.f32 %v1432, 1.442695
        %v1444 = vpow.pop %v1443
        %v1445 = vmul.f32 %v1433, 1.442695
        %v1446 = vpow.pop %v1445
        %v1447 = vmul.f32 %v1434, 1.442695
        %v1448 = vpow.pop %v1447
        %v1449 = vmul.f32 %v1435, 1.442695
        %v1450 = vpow.pop %v1449
        %v1451 = vmul.f32 %v1436, 1.442695
        %v1452 = vpow.pop %v1451
        %v1453 = vsel %vm1404, %v1438, 0.0
        %1454 = vadd.xlane.f32.xlu0 %v1453
        %v1455 = vpop.xlane.xlu0 %1454
        %v1456 = vsel %vm1404, %v1440, 0.0
        %1457 = vadd.xlane.f32.xlu0 %v1456
        %v1458 = vpop.xlane.xlu0 %1457
        %v1459 = vsel %vm1404, %v1442, 0.0
        %1460 = vadd.xlane.f32.xlu0 %v1459
        %v1461 = vpop.xlane.xlu0 %1460
        %v1462 = vsel %vm1404, %v1444, 0.0
        %1463 = vadd.xlane.f32.xlu0 %v1462
        %v1464 = vpop.xlane.xlu0 %1463
        %v1465 = vsel %vm1404, %v1446, 0.0
        %1466 = vadd.xlane.f32.xlu0 %v1465
        %v1467 = vpop.xlane.xlu0 %1466
        %v1468 = vsel %vm1404, %v1448, 0.0
        %1469 = vadd.xlane.f32.xlu0 %v1468
        %v1470 = vpop.xlane.xlu0 %1469
        %v1471 = vsel %vm1404, %v1450, 0.0
        %1472 = vadd.xlane.f32.xlu0 %v1471
        %v1473 = vpop.xlane.xlu0 %1472
        %v1474 = vsel %vm1404, %v1452, 0.0
        %1475 = vadd.xlane.f32.xlu0 %v1474
        %v1476 = vpop.xlane.xlu0 %1475
        %v1477 = vpack.c.bf16 %v1440, %v1438
        %v1478 = vpack.c.bf16 %v1444, %v1442
        %v1479 = vpack.c.bf16 %v1448, %v1446
        %v1480 = vpack.c.bf16 %v1452, %v1450
        %1481 = vrot.lane.b32.xlu0 %v1191, 64
        %v1482 = vpop.permute.xlu0 %1481
        %v1485 = vsel %vm1404, %v1477, 0
        %1487 = vmatprep.subr.bf16.mxu0 0
        %1488 = vmatpush1.bf16.msra.mxu0 %v1482
        %1489 = vmatprep.subr.bf16.mxu0 0
        %1490 = vmatpush1.bf16.msra.mxu0 0
        %1491 = vmatprep.subr.bf16.mxu0 0
        %1492 = vmatpush1.bf16.msra.mxu0 0
        %1493 = vmatprep.subr.bf16.mxu0 0
        %1494 = vmatpush1.bf16.msra.mxu0 0
        %1495 = vmatprep.subr.bf16.mxu0 0
        %1496 = vmatpush1.bf16.msra.mxu0 0
        %1497 = vmatprep.subr.bf16.mxu0 0
        %1498 = vmatpush1.bf16.msra.mxu0 0
        %1499 = vmatprep.subr.bf16.mxu0 0
        %1500 = vmatpush1.bf16.msra.mxu0 0
        %1501 = vmatprep.subr.bf16.mxu0 0
        %1502 = vmatpush1.bf16.msra.mxu0 0
        %1503 = vmatprep.subr.bf16.mxu0 0
        %1504 = vmatpush1.bf16.msra.mxu0 0
        %1505 = vmatprep.subr.bf16.mxu0 0
        %1506 = vmatpush1.bf16.msra.mxu0 0
        %1507 = vmatprep.subr.bf16.mxu0 0
        %1508 = vmatpush1.bf16.msra.mxu0 0
        %1509 = vmatprep.subr.bf16.mxu0 0
        %1510 = vmatpush1.bf16.msra.mxu0 0
        %1511 = vmatprep.subr.bf16.mxu0 0
        %1512 = vmatpush1.bf16.msra.mxu0 0
        %1513 = vmatprep.subr.bf16.mxu0 0
        %1514 = vmatpush1.bf16.msra.mxu0 0
        %1515 = vmatprep.subr.bf16.mxu0 0
        %1516 = vmatpush1.bf16.msra.mxu0 0
        %1517 = vmatprep.subr.bf16.mxu0 0
        %1518 = vmatpush1.bf16.msra.mxu0 0
        %1519 = vmatprep.mubr.bf16.mxu0 0
        %1520 = vmatmul.mubr.bf16.gmra.mrb[0].mxu0 %v1485
        %v1521 = vpop.f32.mrb[0].mxu0
        %v1522 = vadd.f32 0.0, %v1521
        %v1523 = vpop.f32.mrb[0].mxu0
        %v1524 = vpop.f32.mrb[0].mxu0
        %v1525 = vadd.f32 0.0, %v1524
        %v1526 = vpop.f32.mrb[0].mxu0
        %1527 = vdwg.mxu0
        %1528 = vrot.lane.b32.xlu0 %v1192, 64
        %v1529 = vpop.permute.xlu0 %1528
        %v1532 = vsel %vm1404, %v1478, 0
        %1534 = vmatprep.subr.bf16.mxu0 0
        %1535 = vmatpush1.bf16.msra.mxu0 %v1529
        %1536 = vmatprep.subr.bf16.mxu0 0
        %1537 = vmatpush1.bf16.msra.mxu0 0
        %1538 = vmatprep.subr.bf16.mxu0 0
        %1539 = vmatpush1.bf16.msra.mxu0 0
        %1540 = vmatprep.subr.bf16.mxu0 0
        %1541 = vmatpush1.bf16.msra.mxu0 0
        %1542 = vmatprep.subr.bf16.mxu0 0
        %1543 = vmatpush1.bf16.msra.mxu0 0
        %1544 = vmatprep.subr.bf16.mxu0 0
        %1545 = vmatpush1.bf16.msra.mxu0 0
        %1546 = vmatprep.subr.bf16.mxu0 0
        %1547 = vmatpush1.bf16.msra.mxu0 0
        %1548 = vmatprep.subr.bf16.mxu0 0
        %1549 = vmatpush1.bf16.msra.mxu0 0
        %1550 = vmatprep.subr.bf16.mxu0 0
        %1551 = vmatpush1.bf16.msra.mxu0 0
        %1552 = vmatprep.subr.bf16.mxu0 0
        %1553 = vmatpush1.bf16.msra.mxu0 0
        %1554 = vmatprep.subr.bf16.mxu0 0
        %1555 = vmatpush1.bf16.msra.mxu0 0
        %1556 = vmatprep.subr.bf16.mxu0 0
        %1557 = vmatpush1.bf16.msra.mxu0 0
        %1558 = vmatprep.subr.bf16.mxu0 0
        %1559 = vmatpush1.bf16.msra.mxu0 0
        %1560 = vmatprep.subr.bf16.mxu0 0
        %1561 = vmatpush1.bf16.msra.mxu0 0
        %1562 = vmatprep.subr.bf16.mxu0 0
        %1563 = vmatpush1.bf16.msra.mxu0 0
        %1564 = vmatprep.subr.bf16.mxu0 0
        %1565 = vmatpush1.bf16.msra.mxu0 0
        %1566 = vmatprep.mubr.bf16.mxu0 0
        %1567 = vmatmul.mubr.bf16.gmra.mrb[0].mxu0 %v1532
        %v1568 = vpop.f32.mrb[0].mxu0
        %v1569 = vadd.f32 0.0, %v1568
        %v1570 = vpop.f32.mrb[0].mxu0
        %v1571 = vpop.f32.mrb[0].mxu0
        %v1572 = vadd.f32 0.0, %v1571
        %v1573 = vpop.f32.mrb[0].mxu0
        %1574 = vdwg.mxu0
        %1575 = vrot.lane.b32.xlu0 %v1193, 64
        %v1576 = vpop.permute.xlu0 %1575
        %v1579 = vsel %vm1404, %v1479, 0
        %1581 = vmatprep.subr.bf16.mxu0 0
        %1582 = vmatpush1.bf16.msra.mxu0 %v1576
        %1583 = vmatprep.subr.bf16.mxu0 0
        %1584 = vmatpush1.bf16.msra.mxu0 0
        %1585 = vmatprep.subr.bf16.mxu0 0
        %1586 = vmatpush1.bf16.msra.mxu0 0
        %1587 = vmatprep.subr.bf16.mxu0 0
        %1588 = vmatpush1.bf16.msra.mxu0 0
        %1589 = vmatprep.subr.bf16.mxu0 0
        %1590 = vmatpush1.bf16.msra.mxu0 0
        %1591 = vmatprep.subr.bf16.mxu0 0
        %1592 = vmatpush1.bf16.msra.mxu0 0
        %1593 = vmatprep.subr.bf16.mxu0 0
        %1594 = vmatpush1.bf16.msra.mxu0 0
        %1595 = vmatprep.subr.bf16.mxu0 0
        %1596 = vmatpush1.bf16.msra.mxu0 0
        %1597 = vmatprep.subr.bf16.mxu0 0
        %1598 = vmatpush1.bf16.msra.mxu0 0
        %1599 = vmatprep.subr.bf16.mxu0 0
        %1600 = vmatpush1.bf16.msra.mxu0 0
        %1601 = vmatprep.subr.bf16.mxu0 0
        %1602 = vmatpush1.bf16.msra.mxu0 0
        %1603 = vmatprep.subr.bf16.mxu0 0
        %1604 = vmatpush1.bf16.msra.mxu0 0
        %1605 = vmatprep.subr.bf16.mxu0 0
        %1606 = vmatpush1.bf16.msra.mxu0 0
        %1607 = vmatprep.subr.bf16.mxu0 0
        %1608 = vmatpush1.bf16.msra.mxu0 0
        %1609 = vmatprep.subr.bf16.mxu0 0
        %1610 = vmatpush1.bf16.msra.mxu0 0
        %1611 = vmatprep.subr.bf16.mxu0 0
        %1612 = vmatpush1.bf16.msra.mxu0 0
        %1613 = vmatprep.mubr.bf16.mxu0 0
        %1614 = vmatmul.mubr.bf16.gmra.mrb[0].mxu0 %v1579
        %v1615 = vpop.f32.mrb[0].mxu0
        %v1616 = vadd.f32 0.0, %v1615
        %v1617 = vpop.f32.mrb[0].mxu0
        %v1618 = vpop.f32.mrb[0].mxu0
        %v1619 = vadd.f32 0.0, %v1618
        %v1620 = vpop.f32.mrb[0].mxu0
        %1621 = vdwg.mxu0
        %1622 = vrot.lane.b32.xlu0 %v1194, 64
        %v1623 = vpop.permute.xlu0 %1622
        %v1626 = vsel %vm1404, %v1480, 0
        %1628 = vmatprep.subr.bf16.mxu0 0
        %1629 = vmatpush1.bf16.msra.mxu0 %v1623
        %1630 = vmatprep.subr.bf16.mxu0 0
        %1631 = vmatpush1.bf16.msra.mxu0 0
        %1632 = vmatprep.subr.bf16.mxu0 0
        %1633 = vmatpush1.bf16.msra.mxu0 0
        %1634 = vmatprep.subr.bf16.mxu0 0
        %1635 = vmatpush1.bf16.msra.mxu0 0
        %1636 = vmatprep.subr.bf16.mxu0 0
        %1637 = vmatpush1.bf16.msra.mxu0 0
        %1638 = vmatprep.subr.bf16.mxu0 0
        %1639 = vmatpush1.bf16.msra.mxu0 0
        %1640 = vmatprep.subr.bf16.mxu0 0
        %1641 = vmatpush1.bf16.msra.mxu0 0
        %1642 = vmatprep.subr.bf16.mxu0 0
        %1643 = vmatpush1.bf16.msra.mxu0 0
        %1644 = vmatprep.subr.bf16.mxu0 0
        %1645 = vmatpush1.bf16.msra.mxu0 0
        %1646 = vmatprep.subr.bf16.mxu0 0
        %1647 = vmatpush1.bf16.msra.mxu0 0
        %1648 = vmatprep.subr.bf16.mxu0 0
        %1649 = vmatpush1.bf16.msra.mxu0 0
        %1650 = vmatprep.subr.bf16.mxu0 0
        %1651 = vmatpush1.bf16.msra.mxu0 0
        %1652 = vmatprep.subr.bf16.mxu0 0
        %1653 = vmatpush1.bf16.msra.mxu0 0
        %1654 = vmatprep.subr.bf16.mxu0 0
        %1655 = vmatpush1.bf16.msra.mxu0 0
        %1656 = vmatprep.subr.bf16.mxu0 0
        %1657 = vmatpush1.bf16.msra.mxu0 0
        %1658 = vmatprep.subr.bf16.mxu0 0
        %1659 = vmatpush1.bf16.msra.mxu0 0
        %1660 = vmatprep.mubr.bf16.mxu0 0
        %1661 = vmatmul.mubr.bf16.gmra.mrb[0].mxu0 %v1626
        %v1662 = vpop.f32.mrb[0].mxu0
        %v1663 = vadd.f32 0.0, %v1662
        %v1664 = vpop.f32.mrb[0].mxu0
        %v1665 = vpop.f32.mrb[0].mxu0
        %v1666 = vadd.f32 0.0, %v1665
        %v1667 = vpop.f32.mrb[0].mxu0
        %1668 = vdwg.mxu0
        %v1669 = vrcp.pop %v1455
        %v1670 = vrcp.pop %v1458
        %v1671 = vrcp.pop %v1461
        %v1672 = vrcp.pop %v1464
        %v1673 = vrcp.pop %v1467
        %v1674 = vrcp.pop %v1470
        %v1675 = vrcp.pop %v1473
        %v1676 = vrcp.pop %v1476
        %v1677 = vmul.f32 %v1522, %v1669
        %v1678 = vmul.f32 %v1525, %v1670
        %v1679 = vmul.f32 %v1569, %v1671
        %v1680 = vmul.f32 %v1572, %v1672
        %v1681 = vmul.f32 %v1616, %v1673
        %v1682 = vmul.f32 %v1619, %v1674
        %v1683 = vmul.f32 %v1663, %v1675
        %v1684 = vmul.f32 %v1666, %v1676
        %1687 = vrot.lane.b32.xlu0 %v1679, 8
        %v1688 = vpop.permute.xlu0 %1687
        %1689 = vrot.lane.b32.xlu0 %v1680, 8
        %v1690 = vpop.permute.xlu0 %1689
        %1695 = vrot.lane.b32.xlu0 %v1681, 16
        %v1696 = vpop.permute.xlu0 %1695
        %1697 = vrot.lane.b32.xlu0 %v1682, 16
        %v1698 = vpop.permute.xlu0 %1697
        %1703 = vrot.lane.b32.xlu0 %v1683, 24
        %v1704 = vpop.permute.xlu0 %1703
        %1705 = vrot.lane.b32.xlu0 %v1684, 24
        %v1706 = vpop.permute.xlu0 %1705
        %v1709 = vsel %vm1198, %v1677, %v1688
        %v1710 = vsel %vm1198, %v1678, %v1690
        %v1711 = vsel %vm1404, %v1709, %v1696
        %v1712 = vsel %vm1404, %v1710, %v1698
        %vm1713 = vcmask 195584
        %v1714 = vsel %vm1713, %v1711, %v1704
        %v1715 = vsel %vm1713, %v1712, %v1706
        %v1716 = vpack.c.bf16 %v1715, %v1714
        %v1717 = vld [vmem:[%s881] sm:$0xf]
        %v1718 = vld [vmem:[%s881 + $0x4] sm:$0xf]
        %v1719 = vld [vmem:[%s881 + $0x8] sm:$0xf]
        %v1720 = vld [vmem:[%s881 + $0xc] sm:$0xf]
        %v1721 = vld [vmem:[%s884] sm:$0x1]
        %v1723 = vlaneseq
        %v1724 = vshrl.u32 %v1723, 7
        %v1725 = vsub.s32 0, %v1724
        %v1726 = vrot.slane %v1721, %v1725
        %v1732 = vunpack.c.l.b16 %v1717
        %v1733 = vunpack.c.l.b16 %v1718
        %v1734 = vunpack.c.l.b16 %v1719
        %v1735 = vunpack.c.l.b16 %v1720
        %v1736 = vpack.c.b16 %v1733, %v1732
        %v1737 = vpack.c.b16 %v1735, %v1734
        %v1741 = vsel %vm1059, %v1716, 0
        %1743 = vmatprep.subr.bf16.mxu0 0
        %1744 = vmatpush1.bf16.msra.mxu0 %v1736
        %1745 = vmatprep.subr.bf16.mxu0 0
        %1746 = vmatpush1.bf16.msra.mxu0 %v1737
        %1747 = vmatprep.subr.bf16.mxu0 0
        %1748 = vmatpush1.bf16.msra.mxu0 0
        %1749 = vmatprep.subr.bf16.mxu0 0
        %1750 = vmatpush1.bf16.msra.mxu0 0
        %1751 = vmatprep.subr.bf16.mxu0 0
        %1752 = vmatpush1.bf16.msra.mxu0 0
        %1753 = vmatprep.subr.bf16.mxu0 0
        %1754 = vmatpush1.bf16.msra.mxu0 0
        %1755 = vmatprep.subr.bf16.mxu0 0
        %1756 = vmatpush1.bf16.msra.mxu0 0
        %1757 = vmatprep.subr.bf16.mxu0 0
        %1758 = vmatpush1.bf16.msra.mxu0 0
        %1759 = vmatprep.subr.bf16.mxu0 0
        %1760 = vmatpush1.bf16.msra.mxu0 0
        %1761 = vmatprep.subr.bf16.mxu0 0
        %1762 = vmatpush1.bf16.msra.mxu0 0
        %1763 = vmatprep.subr.bf16.mxu0 0
        %1764 = vmatpush1.bf16.msra.mxu0 0
        %1765 = vmatprep.subr.bf16.mxu0 0
        %1766 = vmatpush1.bf16.msra.mxu0 0
        %1767 = vmatprep.subr.bf16.mxu0 0
        %1768 = vmatpush1.bf16.msra.mxu0 0
        %1769 = vmatprep.subr.bf16.mxu0 0
        %1770 = vmatpush1.bf16.msra.mxu0 0
        %1771 = vmatprep.subr.bf16.mxu0 0
        %1772 = vmatpush1.bf16.msra.mxu0 0
        %1773 = vmatprep.subr.bf16.mxu0 0
        %1774 = vmatpush1.bf16.msra.mxu0 0
        %1775 = vmatprep.mubr.bf16.mxu0 0
        %1776 = vmatmul.mubr.bf16.gmra.mrb[0].mxu0 %v1741
        %v1777 = vpop.f32.mrb[0].mxu0
        %v1778 = vadd.f32 %v1726, %v1777
        %v1779 = vpop.f32.mrb[0].mxu0
        %v1780 = vpop.f32.mrb[0].mxu0
        %v1781 = vadd.f32 %v1726, %v1780
        %v1782 = vpop.f32.mrb[0].mxu0
        %1783 = vdwg.mxu0
        %v1784 = vadd.f32 %v1055, %v1778
        %v1785 = vadd.f32 %v1056, %v1781
        %v1786 = vld [vmem:[%s887] sm:$0x1]
        %v1787 = vld [vmem:[%s890] sm:$0x1]
        %v1788 = vsel %vm1059, %v1784, 0.0
        %1789 = vadd.xlane.f32.xlu0 %v1788
        %v1790 = vpop.xlane.xlu0 %1789
        %v1791 = vsel %vm1059, %v1785, 0.0
        %1792 = vadd.xlane.f32.xlu0 %v1791
        %v1793 = vpop.xlane.xlu0 %1792
        %v1794 = vmul.f32 %v1790, %v1066
        %v1795 = vmul.f32 %v1793, %v1066
        %v1796 = vsub.f32 %v1784, %v1794
        %v1797 = vsub.f32 %v1785, %v1795
        %v1798 = vmul.f32 %v1796, %v1796
        %v1799 = vmul.f32 %v1797, %v1797
        %v1800 = vsel %vm1059, %v1798, 0.0
        %1801 = vadd.xlane.f32.xlu0 %v1800
        %v1802 = vpop.xlane.xlu0 %1801
        %v1803 = vsel %vm1059, %v1799, 0.0
        %1804 = vadd.xlane.f32.xlu0 %v1803
        %v1805 = vpop.xlane.xlu0 %1804
        %v1806 = vmul.f32 %v1802, %v1066
        %v1807 = vmul.f32 %v1805, %v1066
        %v1808 = vadd.f32 %v1806, 1e-06
        %v1809 = vadd.f32 %v1807, 1e-06
        %v1810 = vrsqrt.pop %v1808
        %v1811 = vrsqrt.pop %v1809
        %v1812 = vmul.f32 %v1796, %v1810
        %v1813 = vmul.f32 %v1797, %v1811
        %v1815 = vlaneseq
        %v1816 = vshrl.u32 %v1815, 7
        %v1817 = vsub.s32 0, %v1816
        %v1818 = vrot.slane %v1786, %v1817
        %v1820 = vmul.f32 %v1812, %v1818
        %v1821 = vmul.f32 %v1813, %v1818
        %v1823 = vlaneseq
        %v1824 = vshrl.u32 %v1823, 7
        %v1825 = vsub.s32 0, %v1824
        %v1826 = vrot.slane %v1787, %v1825
        %v1828 = vadd.f32 %v1820, %v1826
        %v1829 = vadd.f32 %v1821, %v1826
        %v1830 = vpack.c.bf16 %v1829, %v1828
        %v1831 = vld [vmem:[%s895] sm:$0xf]
        %v1832 = vld [vmem:[%s895 + $0x4] sm:$0xf]
        %v1833 = vld [vmem:[%s895 + $0x8] sm:$0xf]
        %v1834 = vld [vmem:[%s895 + $0xc] sm:$0xf]
        %v1835 = vld [vmem:[%s898] sm:$0x1]
        %v1837 = vlaneseq
        %v1838 = vshrl.u32 %v1837, 7
        %v1839 = vsub.s32 0, %v1838
        %v1840 = vrot.slane %v1835, %v1839
        %v1846 = vunpack.c.l.b16 %v1831
        %v1847 = vunpack.c.l.b16 %v1832
        %v1848 = vunpack.c.l.b16 %v1833
        %v1849 = vunpack.c.l.b16 %v1834
        %v1850 = vpack.c.b16 %v1847, %v1846
        %v1851 = vpack.c.b16 %v1849, %v1848
        %v1855 = vsel %vm1059, %v1830, 0
        %1857 = vmatprep.subr.bf16.mxu0 0
        %1858 = vmatpush1.bf16.msra.mxu0 %v1850
        %1859 = vmatprep.subr.bf16.mxu0 0
        %1860 = vmatpush1.bf16.msra.mxu0 %v1851
        %1861 = vmatprep.subr.bf16.mxu0 0
        %1862 = vmatpush1.bf16.msra.mxu0 0
        %1863 = vmatprep.subr.bf16.mxu0 0
        %1864 = vmatpush1.bf16.msra.mxu0 0
        %1865 = vmatprep.subr.bf16.mxu0 0
        %1866 = vmatpush1.bf16.msra.mxu0 0
        %1867 = vmatprep.subr.bf16.mxu0 0
        %1868 = vmatpush1.bf16.msra.mxu0 0
        %1869 = vmatprep.subr.bf16.mxu0 0
        %1870 = vmatpush1.bf16.msra.mxu0 0
        %1871 = vmatprep.subr.bf16.mxu0 0
        %1872 = vmatpush1.bf16.msra.mxu0 0
        %1873 = vmatprep.subr.bf16.mxu0 0
        %1874 = vmatpush1.bf16.msra.mxu0 0
        %1875 = vmatprep.subr.bf16.mxu0 0
        %1876 = vmatpush1.bf16.msra.mxu0 0
        %1877 = vmatprep.subr.bf16.mxu0 0
        %1878 = vmatpush1.bf16.msra.mxu0 0
        %1879 = vmatprep.subr.bf16.mxu0 0
        %1880 = vmatpush1.bf16.msra.mxu0 0
        %1881 = vmatprep.subr.bf16.mxu0 0
        %1882 = vmatpush1.bf16.msra.mxu0 0
        %1883 = vmatprep.subr.bf16.mxu0 0
        %1884 = vmatpush1.bf16.msra.mxu0 0
        %1885 = vmatprep.subr.bf16.mxu0 0
        %1886 = vmatpush1.bf16.msra.mxu0 0
        %1887 = vmatprep.subr.bf16.mxu0 0
        %1888 = vmatpush1.bf16.msra.mxu0 0
        %1889 = vmatprep.mubr.bf16.mxu0 0
        %1890 = vmatmul.mubr.bf16.gmra.mrb[0].mxu0 %v1855
        %v1891 = vpop.f32.mrb[0].mxu0
        %v1892 = vadd.f32 %v1840, %v1891
        %v1893 = vpop.f32.mrb[0].mxu0
        %v1894 = vpop.f32.mrb[0].mxu0
        %v1895 = vadd.f32 %v1840, %v1894
        %v1896 = vpop.f32.mrb[0].mxu0
        %1897 = vdwg.mxu0
        %v1898 = vmul.f32 %v1892, 0.5
        %v1899 = vmul.f32 %v1895, 0.5
        %v1900 = vmul.f32 %v1892, 0.044715
        %v1901 = vmul.f32 %v1895, 0.044715
        %v1902 = vmul.f32 %v1900, %v1892
        %v1903 = vmul.f32 %v1901, %v1895
        %v1904 = vmul.f32 %v1902, %v1892
        %v1905 = vmul.f32 %v1903, %v1895
        %v1906 = vadd.f32 %v1892, %v1904
        %v1907 = vadd.f32 %v1895, %v1905
        %v1908 = vmul.f32 %v1906, 0.7978846
        %v1909 = vmul.f32 %v1907, 0.7978846
        %v1910 = vtanh.pop %v1908
        %v1911 = vtanh.pop %v1909
        %v1912 = vadd.f32 %v1910, 1.0
        %v1913 = vadd.f32 %v1911, 1.0
        %v1914 = vmul.f32 %v1898, %v1912
        %v1915 = vmul.f32 %v1899, %v1913
        %v1916 = vpack.c.bf16 %v1915, %v1914
        %v1917 = vld [vmem:[%s903] sm:$0xf]
        %v1918 = vld [vmem:[%s903 + $0x4] sm:$0xf]
        %v1919 = vld [vmem:[%s906] sm:$0x1]
        %v1921 = vlaneseq
        %v1922 = vshrl.u32 %v1921, 7
        %v1923 = vsub.s32 0, %v1922
        %v1924 = vrot.slane %v1919, %v1923
        %v1928 = vunpack.c.l.b16 %v1917
        %v1929 = vunpack.c.l.b16 %v1918
        %v1930 = vpack.c.b16 %v1929, %v1928
        %v1933 = vsel %vm1404, %v1916, 0
        %1935 = vmatprep.subr.bf16.mxu0 0
        %1936 = vmatpush1.bf16.msra.mxu0 %v1930
        %1937 = vmatprep.subr.bf16.mxu0 0
        %1938 = vmatpush1.bf16.msra.mxu0 0
        %1939 = vmatprep.subr.bf16.mxu0 0
        %1940 = vmatpush1.bf16.msra.mxu0 0
        %1941 = vmatprep.subr.bf16.mxu0 0
        %1942 = vmatpush1.bf16.msra.mxu0 0
        %1943 = vmatprep.subr.bf16.mxu0 0
        %1944 = vmatpush1.bf16.msra.mxu0 0
        %1945 = vmatprep.subr.bf16.mxu0 0
        %1946 = vmatpush1.bf16.msra.mxu0 0
        %1947 = vmatprep.subr.bf16.mxu0 0
        %1948 = vmatpush1.bf16.msra.mxu0 0
        %1949 = vmatprep.subr.bf16.mxu0 0
        %1950 = vmatpush1.bf16.msra.mxu0 0
        %1951 = vmatprep.subr.bf16.mxu0 0
        %1952 = vmatpush1.bf16.msra.mxu0 0
        %1953 = vmatprep.subr.bf16.mxu0 0
        %1954 = vmatpush1.bf16.msra.mxu0 0
        %1955 = vmatprep.subr.bf16.mxu0 0
        %1956 = vmatpush1.bf16.msra.mxu0 0
        %1957 = vmatprep.subr.bf16.mxu0 0
        %1958 = vmatpush1.bf16.msra.mxu0 0
        %1959 = vmatprep.subr.bf16.mxu0 0
        %1960 = vmatpush1.bf16.msra.mxu0 0
        %1961 = vmatprep.subr.bf16.mxu0 0
        %1962 = vmatpush1.bf16.msra.mxu0 0
        %1963 = vmatprep.subr.bf16.mxu0 0
        %1964 = vmatpush1.bf16.msra.mxu0 0
        %1965 = vmatprep.subr.bf16.mxu0 0
        %1966 = vmatpush1.bf16.msra.mxu0 0
        %1967 = vmatprep.mubr.bf16.mxu0 0
        %1968 = vmatmul.mubr.bf16.gmra.mrb[0].mxu0 %v1933
        %v1969 = vpop.f32.mrb[0].mxu0
        %v1970 = vadd.f32 %v1924, %v1969
        %v1971 = vpop.f32.mrb[0].mxu0
        %v1972 = vpop.f32.mrb[0].mxu0
        %v1973 = vadd.f32 %v1924, %v1972
        %v1974 = vpop.f32.mrb[0].mxu0
        %1975 = vdwg.mxu0
        %v1976 = vadd.f32 %v1784, %v1970
        %v1977 = vadd.f32 %v1785, %v1973
        %1978 = vst.msk [vmem:[%s863] sm:$0xff] %vm1059, %v1976
        %1979 = vst.msk [vmem:[%s863 + $0x8] sm:$0xff] %vm1059, %v1977
        %p1980 = scmp.eq.s32.totalorder %s44, 1
        // Predicated region
        $region125: #{tpu_custom_call.1} parent=99 // pred_check
          %p1981 = pneg %p1980
        $region126: #{tpu_custom_call.1} parent=99 // pred_check_branch
          %1983 = sbr.rel (%p1981) target = $region128
        $region127: #{tpu_custom_call.1} parent=99 // pred_region
          %v1984 = vld [vmem:[%s863] sm:$0xff]
          %v1985 = vld [vmem:[%s863 + $0x8] sm:$0xff]
          %v1986 = vld [vmem:[%s18] sm:$0x1]
          %v1987 = vld [vmem:[%s19] sm:$0x1]
          %v1988 = vsel %vm1059, %v1984, 0.0
          %1989 = vadd.xlane.f32.xlu0 %v1988
          %v1990 = vpop.xlane.xlu0 %1989
          %v1991 = vsel %vm1059, %v1985, 0.0
          %1992 = vadd.xlane.f32.xlu0 %v1991
          %v1993 = vpop.xlane.xlu0 %1992
          %v1994 = vmul.f32 %v1990, %v1066
          %v1995 = vmul.f32 %v1993, %v1066
          %v1996 = vsub.f32 %v1984, %v1994
          %v1997 = vsub.f32 %v1985, %v1995
          %v1998 = vmul.f32 %v1996, %v1996
          %v1999 = vmul.f32 %v1997, %v1997
          %v2000 = vsel %vm1059, %v1998, 0.0
          %2001 = vadd.xlane.f32.xlu0 %v2000
          %v2002 = vpop.xlane.xlu0 %2001
          %v2003 = vsel %vm1059, %v1999, 0.0
          %2004 = vadd.xlane.f32.xlu0 %v2003
          %v2005 = vpop.xlane.xlu0 %2004
          %v2006 = vmul.f32 %v2002, %v1066
          %v2007 = vmul.f32 %v2005, %v1066
          %v2008 = vadd.f32 %v2006, 1e-06
          %v2009 = vadd.f32 %v2007, 1e-06
          %v2010 = vrsqrt.pop %v2008
          %v2011 = vrsqrt.pop %v2009
          %v2012 = vmul.f32 %v1996, %v2010
          %v2013 = vmul.f32 %v1997, %v2011
          %v2015 = vlaneseq
          %v2016 = vshrl.u32 %v2015, 7
          %v2017 = vsub.s32 0, %v2016
          %v2018 = vrot.slane %v1986, %v2017
          %v2020 = vmul.f32 %v2012, %v2018
          %v2021 = vmul.f32 %v2013, %v2018
          %v2023 = vlaneseq
          %v2024 = vshrl.u32 %v2023, 7
          %v2025 = vsub.s32 0, %v2024
          %v2026 = vrot.slane %v1987, %v2025
          %v2028 = vadd.f32 %v2020, %v2026
          %v2029 = vadd.f32 %v2021, %v2026
          %2030 = vst.msk [vmem:[%s863] sm:$0xff] %vm1059, %v2028
          %2031 = vst.msk [vmem:[%s863 + $0x8] sm:$0xff] %vm1059, %v2029
        $region128: #{tpu_custom_call.1} parent=99 // pred_fallthru
          _
        %s2032 = sand.u32 %s544, 1
        %s2033 = scalar_lea.sflag [#allocation4], %s2032
        %s2034 = sand.u32 %s544, 1
        %s2035 = smul.addr %s2034, 16
        %s2036 = scalar_lea.vmem [#allocation11], %s2035
        // Predicated region
        $region129: #{tpu_custom_call.1} parent=99 // pred_check
          %p2037 = pneg %p554
        $region130: #{tpu_custom_call.1} parent=99 // pred_check_branch
          %2039 = sbr.rel (%p2037) target = $region132
        $region131: #{tpu_custom_call.1} parent=99 // pred_region
          %s2041 = ssub.s32 256, 256
          %2042 = vsyncadd %s2033, %s2041
          %s2043 = smul.addr %s43, 2
          %s2044 = smul.addr %s2043, 128
          %s2045 = scalar_lea.hbm %s20, %s2044
          %s2046 = sshll.u32 %s2036, 4
          %s2047 = int_to_ptr.vmem [resolvable:$true] %s2046
          %2052 = dma.vmem_to_hbm [thread:$0]  %s2047, 256, %s2045, %s2033, 128, 128, 8
        $region132: #{tpu_custom_call.1} parent=99 // pred_fallthru
          _
      $region100: #{tpu_custom_call.1} parent=5 // pred_fallthru
        _
      %p2053 = scmp.le.s32.totalorder 2, %s34
      // Predicated region
      $region133: #{tpu_custom_call.1} parent=5 // pred_check
        %p2054 = pneg %p2053
      $region134: #{tpu_custom_call.1} parent=5 // pred_check_branch
        %2056 = sbr.rel (%p2054) target = $region136
      $region135: #{tpu_custom_call.1} parent=5 // pred_region
        %s2057 = ssub.s32 %s34, 2
        // Predicated region
        $region137: #{tpu_custom_call.1} parent=135 // pred_check
          %p2058 = pneg %p560
        $region138: #{tpu_custom_call.1} parent=135 // pred_check_branch
          %2060 = sbr.rel (%p2058) target = $region140
        $region139: #{tpu_custom_call.1} parent=135 // pred_region
          %s2061 = sand.u32 %s545, 1
          %s2062 = scalar_lea.sflag [#allocation4], %s2061
          %s2063 = sand.u32 %s545, 1
          %s2064 = smul.addr %s2063, 16
          %s2065 = scalar_lea.vmem [#allocation11], %s2064
          %2066 = dma.done %s2062, 256
        $region140: #{tpu_custom_call.1} parent=135 // pred_fallthru
          _
      $region136: #{tpu_custom_call.1} parent=5 // pred_fallthru
        _
    $region6: #{tpu_custom_call.1} parent=1 // loop_footer
      %s38 = sadd.s32 1, %s34
    $region7: #{tpu_custom_call.1} parent=1 // loop_footer_branch
      %33 = sbr.rel target = $region3
    $region8: #{tpu_custom_call.1} parent=1 // loop_exit
      _
    %2067 = vsyncpa [#allocation3], 1
    %s2068 = scalar_lea.sflag [#allocation3], 1
    %2069 = vsyncpa %s2068, 1
    %2070 = vsyncpa [#allocation6], 1
    %2071 = vsyncpa [#allocation9], 1
    %s2072 = scalar_lea.sflag [#allocation9], 1
    %2073 = vsyncpa %s2072, 1
    %2074 = vsyncpa [#allocation4], 1
    %s2075 = scalar_lea.sflag [#allocation4], 1
    %2076 = vsyncpa %s2075, 1

</llo_original>
